<compile_context>
chip_gen: v5e
topology: v5e:2x2
jax: 0.10.0
libtpu: 0.0.40
codegen_flags: <defaults>
</compile_context>

<pallas_src>
import functools

import jax
import jax.numpy as jnp
from jax import lax
from jax.experimental import pallas as pl
from jax.experimental.pallas import tpu as pltpu


def _banded_weights(w, W, stack_taps):
    """Fold the width taps + channel mixing of an HWIO conv weight into banded matrices.

    w: (K, K, C, C) HWIO.  With image rows laid out as length-(W*C) vectors and
    zero row-padding in H, returns B of shape (K, W*C, W*C) such that
        conv(x)[h, :] = sum_dh  x_padded_row[h + dh - K//2]  @  B[dh]
    or, when stack_taps, the row-stacked (K*W*C, W*C) version of the same thing.
    Zero padding in W is implicit: the band is simply cut off at the matrix edge.
    """
    K, K2, C, Co = w.shape
    assert K == K2 and C == Co, "square kernel, equal in/out channels expected"
    pad = K // 2
    wi = jnp.arange(W)
    dw = wi[:, None] - wi[None, :] + pad            # tap index for (w_in, w_out)
    valid = (dw >= 0) & (dw < K)
    blocks = w[:, jnp.clip(dw, 0, K - 1)]           # (K, W_in, W_out, C_in, C_out)
    blocks = jnp.where(valid[None, :, :, None, None], blocks, 0.0)
    B = blocks.transpose(0, 1, 3, 2, 4).reshape(K, W * C, W * C)
    if stack_taps:
        B = B.reshape(K * W * C, W * C)
    return B


def _default_stack_taps():
    # v6e / v7x MXUs are 256 wide/deep -> stack the K row taps into one 3*WC-deep
    # contraction.  v5e's 128x128 MXU is already matched by the 128-deep dots and
    # its single vector-store slot dislikes the extra staging stores -> keep the
    # 3-dot form there (per-chip items of the perf review).
    try:
        kind = jax.devices()[0].device_kind.lower()
    except Exception:
        return True
    return not any(v in kind for v in ("v2", "v3", "v4", "v5"))


def _make_rb_kernel(stack_taps, n_row_tiles):
    """Build the fused RB kernel body.

    stack_taps  : fold the K row taps into a single K*WC-deep contraction
                  (v6e/v7x) instead of K accumulate-dots (v5e).
    n_row_tiles : static number of row tiles (grid axis 1); when 1, the halo-read
                  branches are dropped entirely at trace time.
    """

    def rb_kernel(x_ref, B1_ref, b1_ref, B2_ref, b2_ref, out_ref, *scratch):
        # x_ref  : (H, WC)   f32   full image of one batch element, lane-dense rows
        # B*_ref : (K, WC, WC) bf16   [3-dot form]   or  (K*WC, WC) bf16 [stacked]
        # b*_ref : (1, WC)   f32   bias tiled along W
        # out_ref: (Ht, WC)  f32   one output row tile
        # scratch: xs (Ht+4p, WC) bf16, ys (Ht+2p, WC) bf16
        #          [+ stk (Ht+2p, K*WC) bf16 when stack_taps]
        if stack_taps:
            xs_ref, ys_ref, stk_ref = scratch
        else:
            xs_ref, ys_ref = scratch

        H, WC = x_ref.shape
        Ht = out_ref.shape[0]
        K = (B1_ref.shape[0] // WC) if stack_taps else B1_ref.shape[0]
        pad = K // 2
        halo = 2 * pad          # extra x rows above/below the tile that conv1 needs
        Hc1 = Ht + 2 * pad      # y1 rows this step must produce (tile + conv2 halo)
        R = n_row_tiles

        r = pl.program_id(1)
        r0 = r * Ht             # first output row of this tile
        if Ht % 8 == 0:
            r0 = pl.multiple_of(r0, 8)

        # ---- Stage the conv1 input window x[r0-halo : r0+Ht+halo) into bf16
        #      scratch (cast hoisted, done once).  Rows outside the image are
        #      zero; only those <= halo rows are (conditionally) written.
        zhalo = jnp.zeros((halo, WC), jnp.bfloat16)
        xs_ref[halo:halo + Ht, :] = x_ref[pl.ds(r0, Ht), :].astype(jnp.bfloat16)
        if R == 1:
            xs_ref[0:halo, :] = zhalo
            xs_ref[halo + Ht:halo + Ht + halo, :] = zhalo
        else:
            @pl.when(r == 0)
            def _():
                xs_ref[0:halo, :] = zhalo

            @pl.when(r > 0)
            def _():
                xs_ref[0:halo, :] = (
                    x_ref[pl.ds(r0 - halo, halo), :].astype(jnp.bfloat16))

            @pl.when(r == R - 1)
            def _():
                xs_ref[halo + Ht:halo + Ht + halo, :] = zhalo

            @pl.when(r < R - 1)
            def _():
                xs_ref[halo + Ht:halo + Ht + halo, :] = (
                    x_ref[pl.ds(r0 + Ht, halo), :].astype(jnp.bfloat16))

        # ---- conv1 + bias + ReLU for the Hc1 rows conv2 will read.
        if stack_taps:
            # One (Hc1, K*WC) @ (K*WC, WC) dot: the 384-deep contraction fills the
            # 256-wide MXU of v6e/v7x.
            for dh in range(K):
                stk_ref[0:Hc1, dh * WC:(dh + 1) * WC] = xs_ref[dh:dh + Hc1, :]
            acc1 = jnp.dot(stk_ref[0:Hc1, :], B1_ref[...],
                           preferred_element_type=jnp.float32)
        else:
            # K accumulate-dots, 128-deep: matches v5e's 128x128 MXU.
            acc1 = jnp.zeros((Hc1, WC), jnp.float32)
            for dh in range(K):
                acc1 = acc1 + jnp.dot(xs_ref[dh:dh + Hc1, :], B1_ref[dh],
                                      preferred_element_type=jnp.float32)
        y1 = jnp.maximum(acc1 + b1_ref[...], 0.0)

        # y1 rows that fall outside the image are conv2's zero padding, not conv1
        # evaluated past the border: mask them (branch-free VPU select).
        row = lax.broadcasted_iota(jnp.int32, (Hc1, 1), 0) + (r0 - pad)
        y1 = jnp.where((row >= 0) & (row < H), y1, 0.0)
        ys_ref[...] = y1.astype(jnp.bfloat16)

        # ---- conv2 + bias + residual for this step's Ht output rows.
        if stack_taps:
            for dh in range(K):
                stk_ref[0:Ht, dh * WC:(dh + 1) * WC] = ys_ref[dh:dh + Ht, :]
            acc2 = jnp.dot(stk_ref[0:Ht, :], B2_ref[...],
                           preferred_element_type=jnp.float32)
        else:
            acc2 = jnp.zeros((Ht, WC), jnp.float32)
            for dh in range(K):
                acc2 = acc2 + jnp.dot(ys_ref[dh:dh + Ht, :], B2_ref[dh],
                                      preferred_element_type=jnp.float32)
        res = x_ref[pl.ds(r0, Ht), :]
        out_ref[...] = (acc2 + b2_ref[...] + res).astype(out_ref.dtype)

    return rb_kernel


def rb_forward(x, w1, b1, w2, b2, *, row_tile=None, stack_taps=None,
               single_buffer_weights=True):
    """RB.forward.  x: (N, H, W, C) NHWC.  w*: (K, K, C, C) HWIO.  b*: (C,)."""
    N, H, W, C = x.shape
    K = w1.shape[0]
    pad = K // 2
    assert K % 2 == 1
    WC = W * C
    assert WC % 128 == 0, "lane dim W*C must be a multiple of 128"
    # TODO(synk): width-tile the lane dim (Wt*C ~ 256-512 with +-pad column halos
    # and per-tile banded matrices) for realistic n_feat/W; the (W*C)^2 banded
    # weights below are only economical while W*C is a few hundred lanes.

    if stack_taps is None:
        stack_taps = _default_stack_taps()

    if row_tile is None:
        # One grid step per batch element (per-step overhead dominates at small
        # shapes) unless the per-step footprint gets big; then >=128-row tiles.
        if H * WC * 4 <= (4 << 20) or H % 128 != 0:
            row_tile = H
        else:
            row_tile = 128
    assert H % row_tile == 0 and (row_tile % 8 == 0 or row_tile == H)
    assert row_tile >= 2 * pad
    R = H // row_tile

    # Lane-dense operands (row-major relabel, free) and banded bf16 weights.
    x2 = x.reshape(N, H, WC)
    B1 = _banded_weights(w1, W, stack_taps).astype(jnp.bfloat16)
    B2 = _banded_weights(w2, W, stack_taps).astype(jnp.bfloat16)
    b1t = jnp.tile(b1, W).reshape(1, WC).astype(jnp.float32)
    b2t = jnp.tile(b2, W).reshape(1, WC).astype(jnp.float32)

    if stack_taps:
        w_shape, w_index = (K * WC, WC), (lambda n, r: (0, 0))
    else:
        w_shape, w_index = (K, WC, WC), (lambda n, r: (0, 0, 0))

    def w_spec():
        if single_buffer_weights:
            # Constant block index -> the second pipeline buffer is dead VMEM.
            return pl.BlockSpec(w_shape, w_index, pipeline_mode=pl.Buffered(1))
        return pl.BlockSpec(w_shape, w_index)

    scratch = [
        pltpu.VMEM((row_tile + 4 * pad, WC), jnp.bfloat16),   # xs: conv1 input window
        pltpu.VMEM((row_tile + 2 * pad, WC), jnp.bfloat16),   # ys: conv2 input window
    ]
    if stack_taps:
        scratch.append(pltpu.VMEM((row_tile + 2 * pad, K * WC), jnp.bfloat16))

    out = pl.pallas_call(
        _make_rb_kernel(stack_taps, R),
        out_shape=jax.ShapeDtypeStruct((N, H, WC), x.dtype),
        grid=(N, R),
        in_specs=[
            # Full image resident per batch element (block index constant along r).
            # TODO(synk): for very large H, fetch only a (row_tile + 4*pad)-row
            # window per step (pl.ANY + make_async_copy) so VMEM stops scaling with H.
            pl.BlockSpec((None, H, WC), lambda n, r: (n, 0, 0)),
            w_spec(),                                          # B1 (resident)
            pl.BlockSpec((1, WC), lambda n, r: (0, 0)),        # b1
            w_spec(),                                          # B2 (resident)
            pl.BlockSpec((1, WC), lambda n, r: (0, 0)),        # b2
        ],
        out_specs=pl.BlockSpec((None, row_tile, WC), lambda n, r: (n, r, 0)),
        scratch_shapes=scratch,
        compiler_params=pltpu.CompilerParams(
            # Megacore (v7x) splits on the batch axis; splitting on r would make
            # both cores re-fetch the same full-image x block and re-warm scratch.
            dimension_semantics=("parallel", "arbitrary")),
    )(x2, B1, b1t, B2, b2t)
    return out.reshape(N, H, W, C)


def rb_reference(x, w1, b1, w2, b2):
    dn = ("NHWC", "HWIO", "NHWC")
    y1 = lax.conv_general_dilated(x, w1, (1, 1), "SAME", dimension_numbers=dn) + b1
    y1 = jnp.maximum(y1, 0.0)
    y2 = lax.conv_general_dilated(y1, w2, (1, 1), "SAME", dimension_numbers=dn) + b2
    return y2 + x


if __name__ == "__main__":
    N, H, W, C, K = 2, 16, 16, 8, 3   # n_feat=8, kernel_size=3  ->  W*C = 128 lanes

    key = jax.random.PRNGKey(0)
    k1, k2, k3, k4, k5 = jax.random.split(key, 5)
    x  = jax.random.normal(k1, (N, H, W, C), jnp.float32)
    w1 = jax.random.normal(k2, (K, K, C, C), jnp.float32) * 0.1
    b1 = jax.random.normal(k3, (C,), jnp.float32) * 0.1
    w2 = jax.random.normal(k4, (K, K, C, C), jnp.float32) * 0.1
    b2 = jax.random.normal(k5, (C,), jnp.float32) * 0.1

    y_ref = rb_reference(x, w1, b1, w2, b2)

    def run(**kw):
        f = jax.jit(functools.partial(rb_forward, **kw))
        y = f(x, w1, b1, w2, b2)
        jax.block_until_ready(y)
        return y

    def check(y, tag):
        assert y.shape == (N, H, W, C)
        max_err = float(jnp.max(jnp.abs(y - y_ref)))
        # bf16 MXU operands with f32 accumulation / elementwise: compare against
        # the pure-f32 reference at bf16-level tolerance.
        assert jnp.allclose(y, y_ref, atol=2e-2, rtol=2e-2), (
            f"{tag}: mismatch vs reference, max|err|={max_err}")

    # Default config: row_tile = H (one step per batch element), chip-dependent
    # tap stacking, single-buffered constant weight blocks.
    try:
        y = run()
    except Exception:
        # pl.Buffered(1) single-buffering is the only speculative API use here;
        # fall back to the default double-buffering if this JAX/libtpu rejects it.
        y = run(single_buffer_weights=False)
    check(y, "default")

    # Cross-check the row-tiled halo path and the other MXU form.
    y_tiled = run(row_tile=8, stack_taps=(not _default_stack_taps()),
                  single_buffer_weights=False)
    check(y_tiled, "row_tile=8")

    print("KERNEL_OK")
</pallas_src>

<mosaic_0001>
module attributes {stable_mosaic.version = 11 : i64} {
  func.func @rb_kernel(%arg0: i32, %arg1: i32, %arg2: memref<1x16x128xf32, #tpu.memory_space<vmem>>, %arg3: memref<384x128xbf16, #tpu.memory_space<vmem>>, %arg4: memref<1x128xf32, #tpu.memory_space<vmem>>, %arg5: memref<384x128xbf16, #tpu.memory_space<vmem>>, %arg6: memref<1x128xf32, #tpu.memory_space<vmem>>, %arg7: memref<1x16x128xf32, #tpu.memory_space<vmem>>, %arg8: memref<20x128xbf16, #tpu.memory_space<vmem>>, %arg9: memref<18x128xbf16, #tpu.memory_space<vmem>>, %arg10: memref<18x384xbf16, #tpu.memory_space<vmem>>) attributes {dimension_semantics = [#tpu.dimension_semantics<parallel>, #tpu.dimension_semantics<arbitrary>], iteration_bounds = array<i64: 2, 1>, scalar_prefetch = 0 : i64, scratch_operands = 3 : i64, tpu.core_type = #tpu.core_type<tc>, window_params = [{transform_indices = @transform_0, window_bounds = array<i64: 1, 16, 128>}, {pipeline_mode = #tpu.pipeline_mode<synchronous>, transform_indices = @transform_1, window_bounds = array<i64: 384, 128>}, {pipeline_mode = #tpu.pipeline_mode<synchronous>, transform_indices = @transform_2, window_bounds = array<i64: 1, 128>}, {pipeline_mode = #tpu.pipeline_mode<synchronous>, transform_indices = @transform_3, window_bounds = array<i64: 384, 128>}, {pipeline_mode = #tpu.pipeline_mode<synchronous>, transform_indices = @transform_4, window_bounds = array<i64: 1, 128>}, {transform_indices = @transform_5, window_bounds = array<i64: 1, 16, 128>}]} {
    %c16_i32 = arith.constant 16 : i32
    %0 = arith.muli %arg1, %c16_i32 : i32
    %1 = tpu.assume_multiple %0, 8 : i32
    %cst = arith.constant 0.000000e+00 : bf16
    %2 = vector.broadcast %cst : bf16 to vector<2x128xbf16>
    %c0 = arith.constant 0 : index
    %3 = arith.index_cast %1 : i32 to index
    %c0_0 = arith.constant 0 : index
    %4 = vector.load %arg2[%c0, %3, %c0_0] : memref<1x16x128xf32, #tpu.memory_space<vmem>>, vector<1x16x128xf32>
    %5 = vector.shape_cast %4 : vector<1x16x128xf32> to vector<16x128xf32>
    %6 = arith.truncf %5 : vector<16x128xf32> to vector<16x128xbf16>
    %c2 = arith.constant 2 : index
    %c0_1 = arith.constant 0 : index
    %7 = vector.load %arg8[%c2, %c0_1] : memref<20x128xbf16, #tpu.memory_space<vmem>>, vector<16x128xbf16>
    tpu.vector_store %arg8[%c2, %c0_1], %6 {strides = array<i32>} : memref<20x128xbf16, #tpu.memory_space<vmem>>, vector<16x128xbf16>,
    %c0_2 = arith.constant 0 : index
    %c0_3 = arith.constant 0 : index
    %8 = vector.load %arg8[%c0_2, %c0_3] : memref<20x128xbf16, #tpu.memory_space<vmem>>, vector<2x128xbf16>
    tpu.vector_store %arg8[%c0_2, %c0_3], %2 {strides = array<i32>} : memref<20x128xbf16, #tpu.memory_space<vmem>>, vector<2x128xbf16>,
    %c18 = arith.constant 18 : index
    %c0_4 = arith.constant 0 : index
    %9 = vector.load %arg8[%c18, %c0_4] : memref<20x128xbf16, #tpu.memory_space<vmem>>, vector<2x128xbf16>
    tpu.vector_store %arg8[%c18, %c0_4], %2 {strides = array<i32>} : memref<20x128xbf16, #tpu.memory_space<vmem>>, vector<2x128xbf16>,
    %c0_5 = arith.constant 0 : index
    %c0_6 = arith.constant 0 : index
    %10 = vector.load %arg8[%c0_5, %c0_6] : memref<20x128xbf16, #tpu.memory_space<vmem>>, vector<18x128xbf16>
    %c0_7 = arith.constant 0 : index
    %c0_8 = arith.constant 0 : index
    %11 = vector.load %arg10[%c0_7, %c0_8] : memref<18x384xbf16, #tpu.memory_space<vmem>>, vector<18x128xbf16>
    tpu.vector_store %arg10[%c0_7, %c0_8], %10 {strides = array<i32>} : memref<18x384xbf16, #tpu.memory_space<vmem>>, vector<18x128xbf16>,
    %c1 = arith.constant 1 : index
    %c0_9 = arith.constant 0 : index
    %12 = vector.load %arg8[%c1, %c0_9] : memref<20x128xbf16, #tpu.memory_space<vmem>>, vector<18x128xbf16>
    %c0_10 = arith.constant 0 : index
    %c128 = arith.constant 128 : index
    %13 = vector.load %arg10[%c0_10, %c128] : memref<18x384xbf16, #tpu.memory_space<vmem>>, vector<18x128xbf16>
    tpu.vector_store %arg10[%c0_10, %c128], %12 {strides = array<i32>} : memref<18x384xbf16, #tpu.memory_space<vmem>>, vector<18x128xbf16>,
    %c2_11 = arith.constant 2 : index
    %c0_12 = arith.constant 0 : index
    %14 = vector.load %arg8[%c2_11, %c0_12] : memref<20x128xbf16, #tpu.memory_space<vmem>>, vector<18x128xbf16>
    %c0_13 = arith.constant 0 : index
    %c256 = arith.constant 256 : index
    %15 = vector.load %arg10[%c0_13, %c256] : memref<18x384xbf16, #tpu.memory_space<vmem>>, vector<18x128xbf16>
    tpu.vector_store %arg10[%c0_13, %c256], %14 {strides = array<i32>} : memref<18x384xbf16, #tpu.memory_space<vmem>>, vector<18x128xbf16>,
    %c0_14 = arith.constant 0 : index
    %c0_15 = arith.constant 0 : index
    %16 = vector.load %arg10[%c0_14, %c0_15] : memref<18x384xbf16, #tpu.memory_space<vmem>>, vector<18x384xbf16>
    %c0_16 = arith.constant 0 : index
    %c0_17 = arith.constant 0 : index
    %17 = vector.load %arg3[%c0_16, %c0_17] : memref<384x128xbf16, #tpu.memory_space<vmem>>, vector<384x128xbf16>
    %cst_18 = arith.constant dense<0.000000e+00> : vector<18x128xf32>
    %18 = tpu.matmul %16, %17, %cst_18 {dimension_numbers = #tpu.dot_dimension_numbers<[1], [0], [0], [1], [0, 0, 1, 1], [], []>} : vector<18x384xbf16>, vector<384x128xbf16>, vector<18x128xf32> -> vector<18x128xf32>
    %c0_19 = arith.constant 0 : index
    %c0_20 = arith.constant 0 : index
    %19 = vector.load %arg4[%c0_19, %c0_20] : memref<1x128xf32, #tpu.memory_space<vmem>>, vector<1x128xf32>
    %20 = vector.broadcast %19 : vector<1x128xf32> to vector<18x128xf32>
    %21 = arith.addf %18, %20 : vector<18x128xf32>
    %cst_21 = arith.constant 0.000000e+00 : f32
    %22 = vector.broadcast %cst_21 : f32 to vector<18x128xf32>
    %23 = arith.maximumf %21, %22 : vector<18x128xf32>
    %24 = tpu.iota {dimensions = array<i32: 0>} : vector<18x1xi32>
    %c1_i32 = arith.constant 1 : i32
    %25 = arith.subi %1, %c1_i32 : i32
    %26 = vector.broadcast %25 : i32 to vector<18x1xi32>
    %27 = arith.addi %24, %26 : vector<18x1xi32>
    %c0_i32 = arith.constant 0 : i32
    %28 = vector.broadcast %c0_i32 : i32 to vector<18x1xi32>
    %29 = arith.cmpi sge, %27, %28 : vector<18x1xi32>
    %c16_i32_22 = arith.constant 16 : i32
    %30 = vector.broadcast %c16_i32_22 : i32 to vector<18x1xi32>
    %31 = arith.cmpi slt, %27, %30 : vector<18x1xi32>
    %32 = arith.andi %29, %31 : vector<18x1xi1>
    %cst_23 = arith.constant 0.000000e+00 : f32
    %33 = vector.shape_cast %32 : vector<18x1xi1> to vector<18x1xi1>
    %34 = vector.broadcast %33 : vector<18x1xi1> to vector<18x128xi1>
    %35 = vector.broadcast %cst_23 : f32 to vector<18x128xf32>
    %36 = arith.select %34, %23, %35 : vector<18x128xi1>, vector<18x128xf32>
    %37 = arith.truncf %36 : vector<18x128xf32> to vector<18x128xbf16>
    %c0_24 = arith.constant 0 : index
    %c0_25 = arith.constant 0 : index
    %38 = vector.load %arg9[%c0_24, %c0_25] : memref<18x128xbf16, #tpu.memory_space<vmem>>, vector<18x128xbf16>
    tpu.vector_store %arg9[%c0_24, %c0_25], %37 {strides = array<i32>} : memref<18x128xbf16, #tpu.memory_space<vmem>>, vector<18x128xbf16>,
    %c0_26 = arith.constant 0 : index
    %c0_27 = arith.constant 0 : index
    %39 = vector.load %arg9[%c0_26, %c0_27] : memref<18x128xbf16, #tpu.memory_space<vmem>>, vector<16x128xbf16>
    %c0_28 = arith.constant 0 : index
    %c0_29 = arith.constant 0 : index
    %40 = vector.load %arg10[%c0_28, %c0_29] : memref<18x384xbf16, #tpu.memory_space<vmem>>, vector<16x128xbf16>
    tpu.vector_store %arg10[%c0_28, %c0_29], %39 {strides = array<i32>} : memref<18x384xbf16, #tpu.memory_space<vmem>>, vector<16x128xbf16>,
    %c1_30 = arith.constant 1 : index
    %c0_31 = arith.constant 0 : index
    %41 = vector.load %arg9[%c1_30, %c0_31] : memref<18x128xbf16, #tpu.memory_space<vmem>>, vector<16x128xbf16>
    %c0_32 = arith.constant 0 : index
    %c128_33 = arith.constant 128 : index
    %42 = vector.load %arg10[%c0_32, %c128_33] : memref<18x384xbf16, #tpu.memory_space<vmem>>, vector<16x128xbf16>
    tpu.vector_store %arg10[%c0_32, %c128_33], %41 {strides = array<i32>} : memref<18x384xbf16, #tpu.memory_space<vmem>>, vector<16x128xbf16>,
    %c2_34 = arith.constant 2 : index
    %c0_35 = arith.constant 0 : index
    %43 = vector.load %arg9[%c2_34, %c0_35] : memref<18x128xbf16, #tpu.memory_space<vmem>>, vector<16x128xbf16>
    %c0_36 = arith.constant 0 : index
    %c256_37 = arith.constant 256 : index
    %44 = vector.load %arg10[%c0_36, %c256_37] : memref<18x384xbf16, #tpu.memory_space<vmem>>, vector<16x128xbf16>
    tpu.vector_store %arg10[%c0_36, %c256_37], %43 {strides = array<i32>} : memref<18x384xbf16, #tpu.memory_space<vmem>>, vector<16x128xbf16>,
    %c0_38 = arith.constant 0 : index
    %c0_39 = arith.constant 0 : index
    %45 = vector.load %arg10[%c0_38, %c0_39] : memref<18x384xbf16, #tpu.memory_space<vmem>>, vector<16x384xbf16>
    %c0_40 = arith.constant 0 : index
    %c0_41 = arith.constant 0 : index
    %46 = vector.load %arg5[%c0_40, %c0_41] : memref<384x128xbf16, #tpu.memory_space<vmem>>, vector<384x128xbf16>
    %cst_42 = arith.constant dense<0.000000e+00> : vector<16x128xf32>
    %47 = tpu.matmul %45, %46, %cst_42 {dimension_numbers = #tpu.dot_dimension_numbers<[1], [0], [0], [1], [0, 0, 1, 1], [], []>} : vector<16x384xbf16>, vector<384x128xbf16>, vector<16x128xf32> -> vector<16x128xf32>
    %c0_43 = arith.constant 0 : index
    %48 = arith.index_cast %1 : i32 to index
    %c0_44 = arith.constant 0 : index
    %49 = vector.load %arg2[%c0_43, %48, %c0_44] : memref<1x16x128xf32, #tpu.memory_space<vmem>>, vector<1x16x128xf32>
    %50 = vector.shape_cast %49 : vector<1x16x128xf32> to vector<16x128xf32>
    %c0_45 = arith.constant 0 : index
    %c0_46 = arith.constant 0 : index
    %51 = vector.load %arg6[%c0_45, %c0_46] : memref<1x128xf32, #tpu.memory_space<vmem>>, vector<1x128xf32>
    %52 = vector.broadcast %51 : vector<1x128xf32> to vector<16x128xf32>
    %53 = arith.addf %47, %52 : vector<16x128xf32>
    %54 = arith.addf %53, %50 : vector<16x128xf32>
    %c0_47 = arith.constant 0 : index
    %c0_48 = arith.constant 0 : index
    %c0_49 = arith.constant 0 : index
    %55 = vector.load %arg7[%c0_47, %c0_48, %c0_49] : memref<1x16x128xf32, #tpu.memory_space<vmem>>, vector<1x16x128xf32>
    %56 = vector.shape_cast %55 : vector<1x16x128xf32> to vector<16x128xf32>
    %57 = vector.shape_cast %54 : vector<16x128xf32> to vector<1x16x128xf32>
    tpu.vector_store %arg7[%c0_47, %c0_48, %c0_49], %57 {strides = array<i32>} : memref<1x16x128xf32, #tpu.memory_space<vmem>>, vector<1x16x128xf32>,
    return
  }
  func.func @transform_0(%arg0: i32, %arg1: i32) -> (i32, i32, i32) {
    %c0_i32 = arith.constant 0 : i32
    %c0_i32_0 = arith.constant 0 : i32
    %c0_i32_1 = arith.constant 0 : i32
    return %arg0, %c0_i32, %c0_i32_0 : i32, i32, i32
  }
  func.func @transform_1(%arg0: i32, %arg1: i32) -> (i32, i32) {
    %c0_i32 = arith.constant 0 : i32
    %c0_i32_0 = arith.constant 0 : i32
    %c0_i32_1 = arith.constant 0 : i32
    return %c0_i32, %c0_i32_0 : i32, i32
  }
  func.func @transform_2(%arg0: i32, %arg1: i32) -> (i32, i32) {
    %c0_i32 = arith.constant 0 : i32
    %c0_i32_0 = arith.constant 0 : i32
    %c0_i32_1 = arith.constant 0 : i32
    return %c0_i32, %c0_i32_0 : i32, i32
  }
  func.func @transform_3(%arg0: i32, %arg1: i32) -> (i32, i32) {
    %c0_i32 = arith.constant 0 : i32
    %c0_i32_0 = arith.constant 0 : i32
    %c0_i32_1 = arith.constant 0 : i32
    return %c0_i32, %c0_i32_0 : i32, i32
  }
  func.func @transform_4(%arg0: i32, %arg1: i32) -> (i32, i32) {
    %c0_i32 = arith.constant 0 : i32
    %c0_i32_0 = arith.constant 0 : i32
    %c0_i32_1 = arith.constant 0 : i32
    return %c0_i32, %c0_i32_0 : i32, i32
  }
  func.func @transform_5(%arg0: i32, %arg1: i32) -> (i32, i32, i32) {
    %c0_i32 = arith.constant 0 : i32
    %c0_i32_0 = arith.constant 0 : i32
    return %arg0, %arg1, %c0_i32 : i32, i32, i32
  }
}

module attributes {stable_mosaic.version = 11 : i64} {
  func.func @rb_kernel(%arg0: i32, %arg1: i32, %arg2: memref<1x16x128xf32, #tpu.memory_space<vmem>>, %arg3: memref<384x128xbf16, #tpu.memory_space<vmem>>, %arg4: memref<1x128xf32, #tpu.memory_space<vmem>>, %arg5: memref<384x128xbf16, #tpu.memory_space<vmem>>, %arg6: memref<1x128xf32, #tpu.memory_space<vmem>>, %arg7: memref<1x16x128xf32, #tpu.memory_space<vmem>>, %arg8: memref<20x128xbf16, #tpu.memory_space<vmem>>, %arg9: memref<18x128xbf16, #tpu.memory_space<vmem>>, %arg10: memref<18x384xbf16, #tpu.memory_space<vmem>>) attributes {dimension_semantics = [#tpu.dimension_semantics<parallel>, #tpu.dimension_semantics<arbitrary>], iteration_bounds = array<i64: 2, 1>, scalar_prefetch = 0 : i64, scratch_operands = 3 : i64, tpu.core_type = #tpu.core_type<tc>, window_params = [{transform_indices = @transform_0, window_bounds = array<i64: 1, 16, 128>}, {pipeline_mode = #tpu.pipeline_mode<synchronous>, transform_indices = @transform_1, window_bounds = array<i64: 384, 128>}, {pipeline_mode = #tpu.pipeline_mode<synchronous>, transform_indices = @transform_2, window_bounds = array<i64: 1, 128>}, {pipeline_mode = #tpu.pipeline_mode<synchronous>, transform_indices = @transform_3, window_bounds = array<i64: 384, 128>}, {pipeline_mode = #tpu.pipeline_mode<synchronous>, transform_indices = @transform_4, window_bounds = array<i64: 1, 128>}, {transform_indices = @transform_5, window_bounds = array<i64: 1, 16, 128>}]} {
    %c16_i32 = arith.constant 16 : i32
    %0 = arith.muli %arg1, %c16_i32 : i32
    %1 = tpu.assume_multiple %0, 8 : i32
    %cst = arith.constant 0.000000e+00 : bf16
    %2 = vector.broadcast %cst : bf16 to vector<2x128xbf16>
    %c0 = arith.constant 0 : index
    %3 = arith.index_cast %1 : i32 to index
    %c0_0 = arith.constant 0 : index
    %4 = vector.load %arg2[%c0, %3, %c0_0] : memref<1x16x128xf32, #tpu.memory_space<vmem>>, vector<1x16x128xf32>
    %5 = vector.shape_cast %4 : vector<1x16x128xf32> to vector<16x128xf32>
    %6 = arith.truncf %5 : vector<16x128xf32> to vector<16x128xbf16>
    %c2 = arith.constant 2 : index
    %c0_1 = arith.constant 0 : index
    %7 = vector.load %arg8[%c2, %c0_1] : memref<20x128xbf16, #tpu.memory_space<vmem>>, vector<16x128xbf16>
    tpu.vector_store %arg8[%c2, %c0_1], %6 {strides = array<i32>} : memref<20x128xbf16, #tpu.memory_space<vmem>>, vector<16x128xbf16>,
    %c0_2 = arith.constant 0 : index
    %c0_3 = arith.constant 0 : index
    %8 = vector.load %arg8[%c0_2, %c0_3] : memref<20x128xbf16, #tpu.memory_space<vmem>>, vector<2x128xbf16>
    tpu.vector_store %arg8[%c0_2, %c0_3], %2 {strides = array<i32>} : memref<20x128xbf16, #tpu.memory_space<vmem>>, vector<2x128xbf16>,
    %c18 = arith.constant 18 : index
    %c0_4 = arith.constant 0 : index
    %9 = vector.load %arg8[%c18, %c0_4] : memref<20x128xbf16, #tpu.memory_space<vmem>>, vector<2x128xbf16>
    tpu.vector_store %arg8[%c18, %c0_4], %2 {strides = array<i32>} : memref<20x128xbf16, #tpu.memory_space<vmem>>, vector<2x128xbf16>,
    %c0_5 = arith.constant 0 : index
    %c0_6 = arith.constant 0 : index
    %10 = vector.load %arg8[%c0_5, %c0_6] : memref<20x128xbf16, #tpu.memory_space<vmem>>, vector<18x128xbf16>
    %c0_7 = arith.constant 0 : index
    %c0_8 = arith.constant 0 : index
    %11 = vector.load %arg10[%c0_7, %c0_8] : memref<18x384xbf16, #tpu.memory_space<vmem>>, vector<18x128xbf16>
    tpu.vector_store %arg10[%c0_7, %c0_8], %10 {strides = array<i32>} : memref<18x384xbf16, #tpu.memory_space<vmem>>, vector<18x128xbf16>,
    %c1 = arith.constant 1 : index
    %c0_9 = arith.constant 0 : index
    %12 = vector.load %arg8[%c1, %c0_9] : memref<20x128xbf16, #tpu.memory_space<vmem>>, vector<18x128xbf16>
    %c0_10 = arith.constant 0 : index
    %c128 = arith.constant 128 : index
    %13 = vector.load %arg10[%c0_10, %c128] : memref<18x384xbf16, #tpu.memory_space<vmem>>, vector<18x128xbf16>
    tpu.vector_store %arg10[%c0_10, %c128], %12 {strides = array<i32>} : memref<18x384xbf16, #tpu.memory_space<vmem>>, vector<18x128xbf16>,
    %c2_11 = arith.constant 2 : index
    %c0_12 = arith.constant 0 : index
    %14 = vector.load %arg8[%c2_11, %c0_12] : memref<20x128xbf16, #tpu.memory_space<vmem>>, vector<18x128xbf16>
    %c0_13 = arith.constant 0 : index
    %c256 = arith.constant 256 : index
    %15 = vector.load %arg10[%c0_13, %c256] : memref<18x384xbf16, #tpu.memory_space<vmem>>, vector<18x128xbf16>
    tpu.vector_store %arg10[%c0_13, %c256], %14 {strides = array<i32>} : memref<18x384xbf16, #tpu.memory_space<vmem>>, vector<18x128xbf16>,
    %c0_14 = arith.constant 0 : index
    %c0_15 = arith.constant 0 : index
    %16 = vector.load %arg10[%c0_14, %c0_15] : memref<18x384xbf16, #tpu.memory_space<vmem>>, vector<18x384xbf16>
    %c0_16 = arith.constant 0 : index
    %c0_17 = arith.constant 0 : index
    %17 = vector.load %arg3[%c0_16, %c0_17] : memref<384x128xbf16, #tpu.memory_space<vmem>>, vector<384x128xbf16>
    %cst_18 = arith.constant dense<0.000000e+00> : vector<18x128xf32>
    %18 = tpu.matmul %16, %17, %cst_18 {dimension_numbers = #tpu.dot_dimension_numbers<[1], [0], [0], [1], [0, 0, 1, 1], [], []>} : vector<18x384xbf16>, vector<384x128xbf16>, vector<18x128xf32> -> vector<18x128xf32>
    %c0_19 = arith.constant 0 : index
    %c0_20 = arith.constant 0 : index
    %19 = vector.load %arg4[%c0_19, %c0_20] : memref<1x128xf32, #tpu.memory_space<vmem>>, vector<1x128xf32>
    %20 = vector.broadcast %19 : vector<1x128xf32> to vector<18x128xf32>
    %21 = arith.addf %18, %20 : vector<18x128xf32>
    %cst_21 = arith.constant 0.000000e+00 : f32
    %22 = vector.broadcast %cst_21 : f32 to vector<18x128xf32>
    %23 = arith.maximumf %21, %22 : vector<18x128xf32>
    %24 = tpu.iota {dimensions = array<i32: 0>} : vector<18x1xi32>
    %c1_i32 = arith.constant 1 : i32
    %25 = arith.subi %1, %c1_i32 : i32
    %26 = vector.broadcast %25 : i32 to vector<18x1xi32>
    %27 = arith.addi %24, %26 : vector<18x1xi32>
    %c0_i32 = arith.constant 0 : i32
    %28 = vector.broadcast %c0_i32 : i32 to vector<18x1xi32>
    %29 = arith.cmpi sge, %27, %28 : vector<18x1xi32>
    %c16_i32_22 = arith.constant 16 : i32
    %30 = vector.broadcast %c16_i32_22 : i32 to vector<18x1xi32>
    %31 = arith.cmpi slt, %27, %30 : vector<18x1xi32>
    %32 = arith.andi %29, %31 : vector<18x1xi1>
    %cst_23 = arith.constant 0.000000e+00 : f32
    %33 = vector.shape_cast %32 : vector<18x1xi1> to vector<18x1xi1>
    %34 = vector.broadcast %33 : vector<18x1xi1> to vector<18x128xi1>
    %35 = vector.broadcast %cst_23 : f32 to vector<18x128xf32>
    %36 = arith.select %34, %23, %35 : vector<18x128xi1>, vector<18x128xf32>
    %37 = arith.truncf %36 : vector<18x128xf32> to vector<18x128xbf16>
    %c0_24 = arith.constant 0 : index
    %c0_25 = arith.constant 0 : index
    %38 = vector.load %arg9[%c0_24, %c0_25] : memref<18x128xbf16, #tpu.memory_space<vmem>>, vector<18x128xbf16>
    tpu.vector_store %arg9[%c0_24, %c0_25], %37 {strides = array<i32>} : memref<18x128xbf16, #tpu.memory_space<vmem>>, vector<18x128xbf16>,
    %c0_26 = arith.constant 0 : index
    %c0_27 = arith.constant 0 : index
    %39 = vector.load %arg9[%c0_26, %c0_27] : memref<18x128xbf16, #tpu.memory_space<vmem>>, vector<16x128xbf16>
    %c0_28 = arith.constant 0 : index
    %c0_29 = arith.constant 0 : index
    %40 = vector.load %arg10[%c0_28, %c0_29] : memref<18x384xbf16, #tpu.memory_space<vmem>>, vector<16x128xbf16>
    tpu.vector_store %arg10[%c0_28, %c0_29], %39 {strides = array<i32>} : memref<18x384xbf16, #tpu.memory_space<vmem>>, vector<16x128xbf16>,
    %c1_30 = arith.constant 1 : index
    %c0_31 = arith.constant 0 : index
    %41 = vector.load %arg9[%c1_30, %c0_31] : memref<18x128xbf16, #tpu.memory_space<vmem>>, vector<16x128xbf16>
    %c0_32 = arith.constant 0 : index
    %c128_33 = arith.constant 128 : index
    %42 = vector.load %arg10[%c0_32, %c128_33] : memref<18x384xbf16, #tpu.memory_space<vmem>>, vector<16x128xbf16>
    tpu.vector_store %arg10[%c0_32, %c128_33], %41 {strides = array<i32>} : memref<18x384xbf16, #tpu.memory_space<vmem>>, vector<16x128xbf16>,
    %c2_34 = arith.constant 2 : index
    %c0_35 = arith.constant 0 : index
    %43 = vector.load %arg9[%c2_34, %c0_35] : memref<18x128xbf16, #tpu.memory_space<vmem>>, vector<16x128xbf16>
    %c0_36 = arith.constant 0 : index
    %c256_37 = arith.constant 256 : index
    %44 = vector.load %arg10[%c0_36, %c256_37] : memref<18x384xbf16, #tpu.memory_space<vmem>>, vector<16x128xbf16>
    tpu.vector_store %arg10[%c0_36, %c256_37], %43 {strides = array<i32>} : memref<18x384xbf16, #tpu.memory_space<vmem>>, vector<16x128xbf16>,
    %c0_38 = arith.constant 0 : index
    %c0_39 = arith.constant 0 : index
    %45 = vector.load %arg10[%c0_38, %c0_39] : memref<18x384xbf16, #tpu.memory_space<vmem>>, vector<16x384xbf16>
    %c0_40 = arith.constant 0 : index
    %c0_41 = arith.constant 0 : index
    %46 = vector.load %arg5[%c0_40, %c0_41] : memref<384x128xbf16, #tpu.memory_space<vmem>>, vector<384x128xbf16>
    %cst_42 = arith.constant dense<0.000000e+00> : vector<16x128xf32>
    %47 = tpu.matmul %45, %46, %cst_42 {dimension_numbers = #tpu.dot_dimension_numbers<[1], [0], [0], [1], [0, 0, 1, 1], [], []>} : vector<16x384xbf16>, vector<384x128xbf16>, vector<16x128xf32> -> vector<16x128xf32>
    %c0_43 = arith.constant 0 : index
    %48 = arith.index_cast %1 : i32 to index
    %c0_44 = arith.constant 0 : index
    %49 = vector.load %arg2[%c0_43, %48, %c0_44] : memref<1x16x128xf32, #tpu.memory_space<vmem>>, vector<1x16x128xf32>
    %50 = vector.shape_cast %49 : vector<1x16x128xf32> to vector<16x128xf32>
    %c0_45 = arith.constant 0 : index
    %c0_46 = arith.constant 0 : index
    %51 = vector.load %arg6[%c0_45, %c0_46] : memref<1x128xf32, #tpu.memory_space<vmem>>, vector<1x128xf32>
    %52 = vector.broadcast %51 : vector<1x128xf32> to vector<16x128xf32>
    %53 = arith.addf %47, %52 : vector<16x128xf32>
    %54 = arith.addf %53, %50 : vector<16x128xf32>
    %c0_47 = arith.constant 0 : index
    %c0_48 = arith.constant 0 : index
    %c0_49 = arith.constant 0 : index
    %55 = vector.load %arg7[%c0_47, %c0_48, %c0_49] : memref<1x16x128xf32, #tpu.memory_space<vmem>>, vector<1x16x128xf32>
    %56 = vector.shape_cast %55 : vector<1x16x128xf32> to vector<16x128xf32>
    %57 = vector.shape_cast %54 : vector<16x128xf32> to vector<1x16x128xf32>
    tpu.vector_store %arg7[%c0_47, %c0_48, %c0_49], %57 {strides = array<i32>} : memref<1x16x128xf32, #tpu.memory_space<vmem>>, vector<1x16x128xf32>,
    return
  }
  func.func @transform_0(%arg0: i32, %arg1: i32) -> (i32, i32, i32) {
    %c0_i32 = arith.constant 0 : i32
    %c0_i32_0 = arith.constant 0 : i32
    %c0_i32_1 = arith.constant 0 : i32
    return %arg0, %c0_i32, %c0_i32_0 : i32, i32, i32
  }
  func.func @transform_1(%arg0: i32, %arg1: i32) -> (i32, i32) {
    %c0_i32 = arith.constant 0 : i32
    %c0_i32_0 = arith.constant 0 : i32
    %c0_i32_1 = arith.constant 0 : i32
    return %c0_i32, %c0_i32_0 : i32, i32
  }
  func.func @transform_2(%arg0: i32, %arg1: i32) -> (i32, i32) {
    %c0_i32 = arith.constant 0 : i32
    %c0_i32_0 = arith.constant 0 : i32
    %c0_i32_1 = arith.constant 0 : i32
    return %c0_i32, %c0_i32_0 : i32, i32
  }
  func.func @transform_3(%arg0: i32, %arg1: i32) -> (i32, i32) {
    %c0_i32 = arith.constant 0 : i32
    %c0_i32_0 = arith.constant 0 : i32
    %c0_i32_1 = arith.constant 0 : i32
    return %c0_i32, %c0_i32_0 : i32, i32
  }
  func.func @transform_4(%arg0: i32, %arg1: i32) -> (i32, i32) {
    %c0_i32 = arith.constant 0 : i32
    %c0_i32_0 = arith.constant 0 : i32
    %c0_i32_1 = arith.constant 0 : i32
    return %c0_i32, %c0_i32_0 : i32, i32
  }
  func.func @transform_5(%arg0: i32, %arg1: i32) -> (i32, i32, i32) {
    %c0_i32 = arith.constant 0 : i32
    %c0_i32_0 = arith.constant 0 : i32
    return %arg0, %arg1, %c0_i32 : i32, i32, i32
  }
}

</mosaic_0001>

<llo_original>
// kernel: tile.13
$region0: #{tile.13}
  #allocation0 [shape = 's32[1]{0}', space=sflag, size = 0x4, scoped, tag = 'scoped memory for tile.13']
  %s0 = inlined_call_operand.vmem [shape: f32[8], index: 0, kind: input, shape index: {}]
  %s1 = inlined_call_operand.vmem [shape: f32[16,8], index: 1, kind: output, shape index: {}]
  // Predicated region
  $region2: #{tile.13} parent=0 // pred_check
    _
  $region3: #{tile.13} parent=0 // pred_check_branch
    %3 = sbr.rel (0) target = $region5
  $region4: #{tile.13} parent=0 // pred_region
    _
  $region5: #{tile.13} parent=0 // pred_fallthru
    _
  %v4 = vld [vmem:[%s0] ss:$0 sm:$0xff]
  %5 = vst [vmem:[%s1] sm:$0xff] %v4
  %s6 = scalar_lea.vmem %s1, 8
  %7 = vst [vmem:[%s6] sm:$0xff] %v4

// kernel: tile.14
$region0: #{tile.14}
  %s0 = inlined_call_operand.vmem [shape: f32[16,8], index: 0, kind: input, shape index: {}]
  %s1 = inlined_call_operand.vmem [shape: f32[1,128], index: 1, kind: output, shape index: {}]
  $region1: #{tile.14} parent=0
    #allocation0 [shape = 'u8[4096]{0}', space=vmem, size = 0x1000, scoped, tag = 'scoped mem for output reshape']
    %v2 = vld [vmem:[%s0] sm:$0x1]
    %vm3 = vcmask 64512
    %4 = vst.msk [vmem:[#allocation0] sm:$0x1] %vm3, %v2
    %s5 = scalar_lea.vmem %s0, 15
    %v6 = vld [vmem:[%s5] sm:$0x1]
    %7 = vrot.lane.b32.xlu0 %v6, 120
    %v8 = vpop.permute.xlu0 %7
    %vm9 = vcmask 1048512
    %10 = vst.msk [vmem:[#allocation0] sm:$0x1] %vm9, %v8
    %s11 = scalar_lea.vmem %s0, 14
    %v12 = vld [vmem:[%s11] sm:$0x1]
    %13 = vrot.lane.b32.xlu0 %v12, 112
    %v14 = vpop.permute.xlu0 %13
    %vm15 = vcmask 982912
    %16 = vst.msk [vmem:[#allocation0] sm:$0x1] %vm15, %v14
    %s17 = scalar_lea.vmem %s0, 13
    %v18 = vld [vmem:[%s17] sm:$0x1]
    %19 = vrot.lane.b32.xlu0 %v18, 104
    %v20 = vpop.permute.xlu0 %19
    %vm21 = vcmask 917312
    %22 = vst.msk [vmem:[#allocation0] sm:$0x1] %vm21, %v20
    %s23 = scalar_lea.vmem %s0, 12
    %v24 = vld [vmem:[%s23] sm:$0x1]
    %25 = vrot.lane.b32.xlu0 %v24, 96
    %v26 = vpop.permute.xlu0 %25
    %vm27 = vcmask 851712
    %28 = vst.msk [vmem:[#allocation0] sm:$0x1] %vm27, %v26
    %s29 = scalar_lea.vmem %s0, 11
    %v30 = vld [vmem:[%s29] sm:$0x1]
    %31 = vrot.lane.b32.xlu0 %v30, 88
    %v32 = vpop.permute.xlu0 %31
    %vm33 = vcmask 786112
    %34 = vst.msk [vmem:[#allocation0] sm:$0x1] %vm33, %v32
    %s35 = scalar_lea.vmem %s0, 10
    %v36 = vld [vmem:[%s35] sm:$0x1]
    %37 = vrot.lane.b32.xlu0 %v36, 80
    %v38 = vpop.permute.xlu0 %37
    %vm39 = vcmask 720512
    %40 = vst.msk [vmem:[#allocation0] sm:$0x1] %vm39, %v38
    %s41 = scalar_lea.vmem %s0, 9
    %v42 = vld [vmem:[%s41] sm:$0x1]
    %43 = vrot.lane.b32.xlu0 %v42, 72
    %v44 = vpop.permute.xlu0 %43
    %vm45 = vcmask 654912
    %46 = vst.msk [vmem:[#allocation0] sm:$0x1] %vm45, %v44
    %s47 = scalar_lea.vmem %s0, 8
    %v48 = vld [vmem:[%s47] sm:$0x1]
    %49 = vrot.lane.b32.xlu0 %v48, 64
    %v50 = vpop.permute.xlu0 %49
    %vm51 = vcmask 589312
    %52 = vst.msk [vmem:[#allocation0] sm:$0x1] %vm51, %v50
    %s53 = scalar_lea.vmem %s0, 7
    %v54 = vld [vmem:[%s53] sm:$0x1]
    %55 = vrot.lane.b32.xlu0 %v54, 56
    %v56 = vpop.permute.xlu0 %55
    %vm57 = vcmask 523712
    %58 = vst.msk [vmem:[#allocation0] sm:$0x1] %vm57, %v56
    %s59 = scalar_lea.vmem %s0, 6
    %v60 = vld [vmem:[%s59] sm:$0x1]
    %61 = vrot.lane.b32.xlu0 %v60, 48
    %v62 = vpop.permute.xlu0 %61
    %vm63 = vcmask 458112
    %64 = vst.msk [vmem:[#allocation0] sm:$0x1] %vm63, %v62
    %s65 = scalar_lea.vmem %s0, 5
    %v66 = vld [vmem:[%s65] sm:$0x1]
    %67 = vrot.lane.b32.xlu0 %v66, 40
    %v68 = vpop.permute.xlu0 %67
    %vm69 = vcmask 392512
    %70 = vst.msk [vmem:[#allocation0] sm:$0x1] %vm69, %v68
    %s71 = scalar_lea.vmem %s0, 4
    %v72 = vld [vmem:[%s71] sm:$0x1]
    %73 = vrot.lane.b32.xlu0 %v72, 32
    %v74 = vpop.permute.xlu0 %73
    %vm75 = vcmask 326912
    %76 = vst.msk [vmem:[#allocation0] sm:$0x1] %vm75, %v74
    %s77 = scalar_lea.vmem %s0, 3
    %v78 = vld [vmem:[%s77] sm:$0x1]
    %79 = vrot.lane.b32.xlu0 %v78, 24
    %v80 = vpop.permute.xlu0 %79
    %vm81 = vcmask 261312
    %82 = vst.msk [vmem:[#allocation0] sm:$0x1] %vm81, %v80
    %s83 = scalar_lea.vmem %s0, 2
    %v84 = vld [vmem:[%s83] sm:$0x1]
    %85 = vrot.lane.b32.xlu0 %v84, 16
    %v86 = vpop.permute.xlu0 %85
    %vm87 = vcmask 195712
    %88 = vst.msk [vmem:[#allocation0] sm:$0x1] %vm87, %v86
    %s89 = scalar_lea.vmem %s0, 1
    %v90 = vld [vmem:[%s89] sm:$0x1]
    %91 = vrot.lane.b32.xlu0 %v90, 8
    %v92 = vpop.permute.xlu0 %91
    %vm93 = vcmask 130112
    %94 = vst.msk [vmem:[#allocation0] sm:$0x1] %vm93, %v92
    %s96 = ssub.s32 2, 1
    %v97 = vld [vmem:[#allocation0] sm:%s96]
    %s99 = ssub.s32 2, 1
    %100 = vst [vmem:[%s1] sm:%s99] %v97

// kernel: rb_forward.1
$region0: #{rb_forward.1}
  #allocation0 [shape = 'u32[]', space=smem, size = 0x4, offset = 0x4, fixed_abs, tag = 'smem constant byte address 0x4 - core index']
  #allocation1 [shape = 'u32[72,128]{1,0:T(1,128)}', space=vmem, size = 0x9000, scoped, tag = 'internal scratch']
  #allocation2 [shape = 'bf16[20,128]{1,0:T(8,128)(2,1)}', space=vmem, size = 0x1800, scoped, tag = 'scratch operand']
  #allocation3 [shape = 'bf16[18,128]{1,0:T(8,128)(2,1)}', space=vmem, size = 0x1800, scoped, tag = 'scratch operand']
  #allocation4 [shape = 'bf16[18,384]{1,0:T(8,128)(2,1)}', space=vmem, size = 0x4800, scoped, tag = 'scratch operand']
  %s0 = inlined_call_operand.vmem [shape: f32[2,16,128], index: 0, kind: input, shape index: {}]
  %s1 = inlined_call_operand.vmem [shape: bf16[384,128], index: 1, kind: input, shape index: {}]
  %s2 = inlined_call_operand.vmem [shape: f32[1,128], index: 2, kind: input, shape index: {}]
  %s3 = inlined_call_operand.vmem [shape: bf16[384,128], index: 3, kind: input, shape index: {}]
  %s4 = inlined_call_operand.vmem [shape: f32[1,128], index: 4, kind: input, shape index: {}]
  %s5 = inlined_call_operand.vmem [shape: f32[2,16,128], index: 5, kind: output, shape index: {}]
  %s6 = sld [smem:[#allocation0]]
  $region53: #{rb_forward.1} parent=0
    _
  %s8 = ssub.s32 1, %s6
  %s9 = scalar_select 0, %s8, %s6
  loop: start=0, step=1, limit=4
  $region2: #{rb_forward.1} parent=0 // loop_pre_header
    _
  $region3: #{rb_forward.1} parent=0 // loop_header
    %s11 = sphi 0, %s15
    %p12 = scmp.ge.s32.totalorder %s11, 4
    %s18 = sphi 0, %s30
    %s19 = sphi 0, %s26
    %s20 = sphi 0, %s18
    %s21 = sphi 0, %s19
    %s22 = sphi 0, %s20
    %s23 = sphi 0, %s21
    %s33 = sphi 0, %s35
    %s36 = sphi 0, %s33
    %s37 = sphi 0, %s36
    %s53 = sphi 0, %s37
    %s57 = sphi 0, %s57
    %s59 = sphi 0, %s57
    %s60 = sphi 0, %s59
    %s74 = sphi 0, %s60
    %s78 = sphi 0, %s78
    %s80 = sphi 0, %s78
    %s81 = sphi 0, %s80
    %s95 = sphi 0, %s81
    %s99 = sphi 0, %s99
    %s101 = sphi 0, %s99
    %s102 = sphi 0, %s101
    %s116 = sphi 0, %s102
    %s120 = sphi 0, %s120
    %s122 = sphi 0, %s120
    %s123 = sphi 0, %s122
    %s137 = sphi 0, %s123
    %s145 = sphi 0, %s147
    %s148 = sphi 0, %s145
    %s149 = sphi 0, %s148
    %s165 = sphi 0, %s149
  $region4: #{rb_forward.1} parent=0 // loop_header_branch
    %14 = sbr.rel (%p12) target = $region8
  $region5: #{rb_forward.1} parent=0 // loop_body
    %s16 = ssub.s32 %s11, 1
    %s17 = ssub.s32 %s11, 2
    %s24 = sadd.s32 1, %s19
    %p25 = scmp.ge.s32.totalorder %s24, 1
    %s26 = scalar_select %p25, 0, %s24
    %s27 = sadd.s32 1, %s18
    %s28 = scalar_select %p25, %s27, %s18
    %p29 = scmp.ge.s32.totalorder %s28, 2
    %s30 = scalar_select %p29, 0, %s28
    %s31 = ssub.s32 %s18, %s30
    %p32 = scmp.eq.s32.totalorder %s31, 0
    %s34 = sadd.s32 %s33, 1
    %s35 = scalar_select %p32, %s33, %s34
    %p38 = pneg %p32
    %p39 = scmp.eq.s32.totalorder %s11, 1
    %p40 = por %p38, %p39
    %p41 = scmp.ne.s32.totalorder %s33, %s36
    %p42 = scmp.eq.s32.totalorder %s11, 0
    %p43 = por %p41, %p42
    %p44 = scmp.ne.s32.totalorder %s33, %s36
    %p45 = scmp.eq.s32.totalorder %s16, 1
    %p46 = por %p44, %p45
    %p47 = scmp.ne.s32.totalorder %s36, %s37
    %p48 = scmp.eq.s32.totalorder %s16, 0
    %p49 = por %p47, %p48
    %p50 = scmp.ne.s32.totalorder %s36, %s37
    %p51 = scmp.eq.s32.totalorder %s17, 1
    %p52 = por %p50, %p51
    %p54 = scmp.ne.s32.totalorder %s37, %s53
    %p55 = scmp.eq.s32.totalorder %s17, 0
    %p56 = por %p54, %p55
    %s58 = sadd.s32 %s57, 1
    %p61 = scmp.eq.s32.totalorder %s11, 1
    %p62 = scmp.ne.s32.totalorder %s57, %s59
    %p63 = scmp.eq.s32.totalorder %s11, 0
    %p64 = por %p62, %p63
    %p65 = scmp.ne.s32.totalorder %s57, %s59
    %p66 = scmp.eq.s32.totalorder %s16, 1
    %p67 = por %p65, %p66
    %p68 = scmp.ne.s32.totalorder %s59, %s60
    %p69 = scmp.eq.s32.totalorder %s16, 0
    %p70 = por %p68, %p69
    %p71 = scmp.ne.s32.totalorder %s59, %s60
    %p72 = scmp.eq.s32.totalorder %s17, 1
    %p73 = por %p71, %p72
    %p75 = scmp.ne.s32.totalorder %s60, %s74
    %p76 = scmp.eq.s32.totalorder %s17, 0
    %p77 = por %p75, %p76
    %s79 = sadd.s32 %s78, 1
    %p82 = scmp.eq.s32.totalorder %s11, 1
    %p83 = scmp.ne.s32.totalorder %s78, %s80
    %p84 = scmp.eq.s32.totalorder %s11, 0
    %p85 = por %p83, %p84
    %p86 = scmp.ne.s32.totalorder %s78, %s80
    %p87 = scmp.eq.s32.totalorder %s16, 1
    %p88 = por %p86, %p87
    %p89 = scmp.ne.s32.totalorder %s80, %s81
    %p90 = scmp.eq.s32.totalorder %s16, 0
    %p91 = por %p89, %p90
    %p92 = scmp.ne.s32.totalorder %s80, %s81
    %p93 = scmp.eq.s32.totalorder %s17, 1
    %p94 = por %p92, %p93
    %p96 = scmp.ne.s32.totalorder %s81, %s95
    %p97 = scmp.eq.s32.totalorder %s17, 0
    %p98 = por %p96, %p97
    %s100 = sadd.s32 %s99, 1
    %p103 = scmp.eq.s32.totalorder %s11, 1
    %p104 = scmp.ne.s32.totalorder %s99, %s101
    %p105 = scmp.eq.s32.totalorder %s11, 0
    %p106 = por %p104, %p105
    %p107 = scmp.ne.s32.totalorder %s99, %s101
    %p108 = scmp.eq.s32.totalorder %s16, 1
    %p109 = por %p107, %p108
    %p110 = scmp.ne.s32.totalorder %s101, %s102
    %p111 = scmp.eq.s32.totalorder %s16, 0
    %p112 = por %p110, %p111
    %p113 = scmp.ne.s32.totalorder %s101, %s102
    %p114 = scmp.eq.s32.totalorder %s17, 1
    %p115 = por %p113, %p114
    %p117 = scmp.ne.s32.totalorder %s102, %s116
    %p118 = scmp.eq.s32.totalorder %s17, 0
    %p119 = por %p117, %p118
    %s121 = sadd.s32 %s120, 1
    %p124 = scmp.eq.s32.totalorder %s11, 1
    %p125 = scmp.ne.s32.totalorder %s120, %s122
    %p126 = scmp.eq.s32.totalorder %s11, 0
    %p127 = por %p125, %p126
    %p128 = scmp.ne.s32.totalorder %s120, %s122
    %p129 = scmp.eq.s32.totalorder %s16, 1
    %p130 = por %p128, %p129
    %p131 = scmp.ne.s32.totalorder %s122, %s123
    %p132 = scmp.eq.s32.totalorder %s16, 0
    %p133 = por %p131, %p132
    %p134 = scmp.ne.s32.totalorder %s122, %s123
    %p135 = scmp.eq.s32.totalorder %s17, 1
    %p136 = por %p134, %p135
    %p138 = scmp.ne.s32.totalorder %s123, %s137
    %p139 = scmp.eq.s32.totalorder %s17, 0
    %p140 = por %p138, %p139
    %s141 = ssub.s32 %s18, %s30
    %s142 = ssub.s32 %s19, %s26
    %s143 = sor.u32 %s141, %s142
    %p144 = scmp.eq.s32.totalorder %s143, 0
    %s146 = sadd.s32 %s145, 1
    %s147 = scalar_select %p144, %s145, %s146
    %p150 = pneg %p144
    %p151 = scmp.eq.s32.totalorder %s11, 1
    %p152 = por %p150, %p151
    %p153 = scmp.ne.s32.totalorder %s145, %s148
    %p154 = scmp.eq.s32.totalorder %s11, 0
    %p155 = por %p153, %p154
    %p156 = scmp.ne.s32.totalorder %s145, %s148
    %p157 = scmp.eq.s32.totalorder %s16, 1
    %p158 = por %p156, %p157
    %p159 = scmp.ne.s32.totalorder %s148, %s149
    %p160 = scmp.eq.s32.totalorder %s16, 0
    %p161 = por %p159, %p160
    %p162 = scmp.ne.s32.totalorder %s148, %s149
    %p163 = scmp.eq.s32.totalorder %s17, 1
    %p164 = por %p162, %p163
    %p166 = scmp.ne.s32.totalorder %s149, %s165
    %p167 = scmp.eq.s32.totalorder %s17, 0
    %p168 = por %p166, %p167
    %p169 = scmp.le.s32.totalorder 1, %s11
    %p170 = scmp.lt.s32.totalorder %s11, 3
    %p171 = pnand %p169, %p170
    %p172 = pneg %p171
    // Predicated region
    $region9: #{rb_forward.1} parent=5 // pred_check
      _
    $region10: #{rb_forward.1} parent=5 // pred_check_branch
      %174 = sbr.rel (%p171) target = $region12
    $region11: #{rb_forward.1} parent=5 // pred_region
      %s175 = ssub.s32 %s11, 1
      // Predicated region
      $region13: #{rb_forward.1} parent=11 // pred_check
        %p176 = pneg %p70
      $region14: #{rb_forward.1} parent=11 // pred_check_branch
        %178 = sbr.rel (%p176) target = $region16
      $region15: #{rb_forward.1} parent=11 // pred_region
        _
      $region16: #{rb_forward.1} parent=11 // pred_fallthru
        _
      // Predicated region
      $region17: #{rb_forward.1} parent=11 // pred_check
        %p179 = pneg %p91
      $region18: #{rb_forward.1} parent=11 // pred_check_branch
        %181 = sbr.rel (%p179) target = $region20
      $region19: #{rb_forward.1} parent=11 // pred_region
        _
      $region20: #{rb_forward.1} parent=11 // pred_fallthru
        _
      // Predicated region
      $region21: #{rb_forward.1} parent=11 // pred_check
        %p182 = pneg %p112
      $region22: #{rb_forward.1} parent=11 // pred_check_branch
        %184 = sbr.rel (%p182) target = $region24
      $region23: #{rb_forward.1} parent=11 // pred_region
        _
      $region24: #{rb_forward.1} parent=11 // pred_fallthru
        _
      // Predicated region
      $region25: #{rb_forward.1} parent=11 // pred_check
        %p185 = pneg %p133
      $region26: #{rb_forward.1} parent=11 // pred_check_branch
        %187 = sbr.rel (%p185) target = $region28
      $region27: #{rb_forward.1} parent=11 // pred_region
        _
      $region28: #{rb_forward.1} parent=11 // pred_fallthru
        _
    $region12: #{rb_forward.1} parent=5 // pred_fallthru
      _
    %p188 = scmp.lt.s32.totalorder %s11, 2
    // Predicated region
    $region29: #{rb_forward.1} parent=5 // pred_check
      %p189 = pneg %p188
    $region30: #{rb_forward.1} parent=5 // pred_check_branch
      %191 = sbr.rel (%p189) target = $region32
    $region31: #{rb_forward.1} parent=5 // pred_region
      // Predicated region
      $region33: #{rb_forward.1} parent=31 // pred_check
        %p192 = pneg %p43
      $region34: #{rb_forward.1} parent=31 // pred_check_branch
        %194 = sbr.rel (%p192) target = $region36
      $region35: #{rb_forward.1} parent=31 // pred_region
        %p195 = scmp.lt.s32.totalorder %s18, 1
        %s196 = scalar_select %p195, %s18, 1
        %s197 = smul.addr %s196, 2
        %s198 = smul.addr %s197, 8
        %s199 = scalar_lea.vmem %s0, %s198
      $region36: #{rb_forward.1} parent=31 // pred_fallthru
        _
    $region32: #{rb_forward.1} parent=5 // pred_fallthru
      _
    %p200 = scmp.le.s32.totalorder 1, %s11
    %p201 = scmp.lt.s32.totalorder %s11, 3
    %p202 = pnand %p200, %p201
    %p203 = pneg %p202
    // Predicated region
    $region37: #{rb_forward.1} parent=5 // pred_check
      _
    $region38: #{rb_forward.1} parent=5 // pred_check_branch
      %205 = sbr.rel (%p202) target = $region40
    $region39: #{rb_forward.1} parent=5 // pred_region
      %s206 = ssub.s32 %s11, 1
      %p207 = scmp.lt.s32.totalorder %s20, 1
      %s208 = scalar_select %p207, %s20, 1
      %s209 = smul.addr %s208, 2
      %s210 = smul.addr %s209, 8
      %s211 = scalar_lea.vmem %s0, %s210
      %p212 = pneg %p49
      %p213 = pneg %p46
      %p214 = pneg %p70
      %p215 = pneg %p67
      %p216 = pneg %p91
      %p217 = pneg %p88
      %p218 = pneg %p112
      %p219 = pneg %p109
      %p220 = pneg %p133
      %p221 = pneg %p130
      %p222 = pneg %p161
      %p223 = pneg %p158
      %s224 = smul.u32 2, %s21
      %p225 = scmp.lt.s32.totalorder %s20, 1
      %s226 = scalar_select %p225, %s20, 1
      %p227 = scmp.lt.s32.totalorder %s224, 1
      %s228 = scalar_select %p227, %s224, 1
      %s229 = smul.addr %s226, 2
      %s230 = sadd.s32 %s228, %s229
      %s231 = smul.addr %s230, 8
      %s232 = scalar_lea.vmem %s5, %s231
      %p233 = scmp.lt.s32.totalorder %s20, 1
      %s234 = scalar_select %p233, %s20, 1
      %s235 = smul.addr %s234, 2
      %s236 = smul.addr %s235, 8
      %s237 = scalar_lea.vmem %s0, %s236
      %s238 = smul.u32 2, %s21
      %p239 = scmp.lt.s32.totalorder %s20, 1
      %s240 = scalar_select %p239, %s20, 1
      %p241 = scmp.lt.s32.totalorder %s238, 1
      %s242 = scalar_select %p241, %s238, 1
      %s243 = smul.addr %s240, 2
      %s244 = sadd.s32 %s242, %s243
      %s245 = smul.addr %s244, 8
      %s246 = scalar_lea.vmem %s5, %s245
      %s247 = smul.u32 2, %s21
      %s249 = smul.u32 %s21, 16
      %s250 = scalar_lea.vmem %s237, %s249
      %v251 = vld [vmem:[%s250] sm:$0xff]
      %v252 = vld [vmem:[%s250 + $0x8] sm:$0xff]
      %v253 = vpack.c.bf16 %v251, %v251
      %v254 = vpack.c.bf16 %v252, %v252
      %vm257 = vcmask 1040384
      %vm258 = vcmask 1044484
      %vm259 = vmor %vm257, %vm258
      %v260 = vrot.slane %v253, 7
      %v261 = vrot.slane %v260, 4
      %v262 = vrot.slane %v254, 7
      %v263 = vsel %vm259, %v261, %v262
      %v264 = vrot.slane %v262, 4
      %268 = vst [vmem:[#allocation2] sm:$0xe] %v260
      %269 = vst [vmem:[#allocation2 + $0x4] sm:$0xf] %v263
      %270 = vst [vmem:[#allocation2 + $0x8] sm:$0x1] %v264
      %271 = vst [vmem:[#allocation2] sm:$0x1] 0
      %272 = vst [vmem:[#allocation2 + $0x8] sm:$0x2] 0
      %v273 = vld [vmem:[#allocation2] sm:$0xf]
      %v274 = vld [vmem:[#allocation2 + $0x4] sm:$0xf]
      %v275 = vld [vmem:[#allocation2 + $0x8] sm:$0x1]
      %276 = vst [vmem:[#allocation4] sm:$0xf] %v273
      %277 = vst [vmem:[#allocation4 + $0xc] sm:$0xf] %v274
      %278 = vst [vmem:[#allocation4 + $0x18] sm:$0x1] %v275
      %v279 = vld [vmem:[#allocation2] sm:$0xf]
      %v280 = vld [vmem:[#allocation2 + $0x4] sm:$0xf]
      %v281 = vld [vmem:[#allocation2 + $0x8] sm:$0x3]
      %vm282 = vsmask.f32 3328
      %vm283 = vsmask.f32 7440
      %vm284 = vmor %vm282, %vm283
      %v286 = vshrl.u32 %v279, 16
      %v288 = vrot.slane %v286, 4
      %v289 = vshll.u32 %v279, 16
      %v291 = vrot.slane %v289, 5
      %v292 = vor.u32 %v288, %v291
      %v293 = vrot.slane %v292, 4
      %v295 = vshll.u32 %v280, 16
      %v297 = vrot.slane %v295, 5
      %v298 = vsel %vm284, %v293, %v297
      %v299 = vshrl.u32 %v280, 16
      %v301 = vrot.slane %v299, 4
      %v302 = vor.u32 %v301, %v297
      %v303 = vrot.slane %v302, 4
      %v305 = vshll.u32 %v281, 16
      %v307 = vrot.slane %v305, 5
      %v308 = vsel %vm284, %v303, %v307
      %v309 = vshrl.u32 %v281, 16
      %v311 = vrot.slane %v309, 4
      %v312 = vor.u32 %v311, %v307
      %v313 = vrot.slane %v312, 4
      %317 = vst [vmem:[#allocation4 + $0x4] sm:$0xf] %v298
      %318 = vst [vmem:[#allocation4 + $0x10] sm:$0xf] %v308
      %319 = vst [vmem:[#allocation4 + $0x1c] sm:$0x1] %v313
      %v320 = vld [vmem:[#allocation2] sm:$0xe]
      %v321 = vld [vmem:[#allocation2 + $0x4] sm:$0xf]
      %v322 = vld [vmem:[#allocation2 + $0x8] sm:$0x3]
      %vm326 = vcmask 1042432
      %vm327 = vcmask 1046532
      %vm328 = vmor %vm326, %vm327
      %v329 = vrot.slane %v320, 5
      %v330 = vrot.slane %v329, 4
      %v331 = vrot.slane %v321, 5
      %v332 = vsel %vm328, %v330, %v331
      %v333 = vrot.slane %v331, 4
      %v334 = vrot.slane %v322, 5
      %v335 = vsel %vm328, %v333, %v334
      %v336 = vrot.slane %v334, 4
      %340 = vst [vmem:[#allocation4 + $0x8] sm:$0xf] %v332
      %341 = vst [vmem:[#allocation4 + $0x14] sm:$0xf] %v335
      %342 = vst [vmem:[#allocation4 + $0x20] sm:$0x1] %v336
      %v343 = vld [vmem:[#allocation4] sm:$0xff]
      %v344 = vld [vmem:[#allocation4 + $0x8] sm:$0xf]
      %v345 = vld [vmem:[#allocation4 + $0xc] sm:$0xff]
      %v346 = vld [vmem:[#allocation4 + $0x14] sm:$0xf]
      %v347 = vld [vmem:[#allocation4 + $0x18] sm:$0x11]
      %v348 = vld [vmem:[#allocation4 + $0x20] sm:$0x1]
      %v349 = vld [vmem:[%s1] sm:$0xf]
      %v350 = vld [vmem:[%s1 + $0x4] sm:$0xf]
      %v351 = vld [vmem:[%s1 + $0x8] sm:$0xf]
      %v352 = vld [vmem:[%s1 + $0xc] sm:$0xf]
      %v353 = vld [vmem:[%s1 + $0x10] sm:$0xf]
      %v354 = vld [vmem:[%s1 + $0x14] sm:$0xf]
      %v355 = vld [vmem:[%s1 + $0x18] sm:$0xf]
      %v356 = vld [vmem:[%s1 + $0x1c] sm:$0xf]
      %v357 = vld [vmem:[%s1 + $0x20] sm:$0xf]
      %v358 = vld [vmem:[%s1 + $0x24] sm:$0xf]
      %v359 = vld [vmem:[%s1 + $0x28] sm:$0xf]
      %v360 = vld [vmem:[%s1 + $0x2c] sm:$0xf]
      %v361 = vld [vmem:[%s1 + $0x30] sm:$0xf]
      %v362 = vld [vmem:[%s1 + $0x34] sm:$0xf]
      %v363 = vld [vmem:[%s1 + $0x38] sm:$0xf]
      %v364 = vld [vmem:[%s1 + $0x3c] sm:$0xf]
      %v365 = vld [vmem:[%s1 + $0x40] sm:$0xf]
      %v366 = vld [vmem:[%s1 + $0x44] sm:$0xf]
      %v367 = vld [vmem:[%s1 + $0x48] sm:$0xf]
      %v368 = vld [vmem:[%s1 + $0x4c] sm:$0xf]
      %v369 = vld [vmem:[%s1 + $0x50] sm:$0xf]
      %v370 = vld [vmem:[%s1 + $0x54] sm:$0xf]
      %v371 = vld [vmem:[%s1 + $0x58] sm:$0xf]
      %v372 = vld [vmem:[%s1 + $0x5c] sm:$0xf]
      %v373 = vld [vmem:[%s1 + $0x60] sm:$0xf]
      %v374 = vld [vmem:[%s1 + $0x64] sm:$0xf]
      %v375 = vld [vmem:[%s1 + $0x68] sm:$0xf]
      %v376 = vld [vmem:[%s1 + $0x6c] sm:$0xf]
      %v377 = vld [vmem:[%s1 + $0x70] sm:$0xf]
      %v378 = vld [vmem:[%s1 + $0x74] sm:$0xf]
      %v379 = vld [vmem:[%s1 + $0x78] sm:$0xf]
      %v380 = vld [vmem:[%s1 + $0x7c] sm:$0xf]
      %v381 = vld [vmem:[%s1 + $0x80] sm:$0xf]
      %v382 = vld [vmem:[%s1 + $0x84] sm:$0xf]
      %v383 = vld [vmem:[%s1 + $0x88] sm:$0xf]
      %v384 = vld [vmem:[%s1 + $0x8c] sm:$0xf]
      %v385 = vld [vmem:[%s1 + $0x90] sm:$0xf]
      %v386 = vld [vmem:[%s1 + $0x94] sm:$0xf]
      %v387 = vld [vmem:[%s1 + $0x98] sm:$0xf]
      %v388 = vld [vmem:[%s1 + $0x9c] sm:$0xf]
      %v389 = vld [vmem:[%s1 + $0xa0] sm:$0xf]
      %v390 = vld [vmem:[%s1 + $0xa4] sm:$0xf]
      %v391 = vld [vmem:[%s1 + $0xa8] sm:$0xf]
      %v392 = vld [vmem:[%s1 + $0xac] sm:$0xf]
      %v393 = vld [vmem:[%s1 + $0xb0] sm:$0xf]
      %v394 = vld [vmem:[%s1 + $0xb4] sm:$0xf]
      %v395 = vld [vmem:[%s1 + $0xb8] sm:$0xf]
      %v396 = vld [vmem:[%s1 + $0xbc] sm:$0xf]
      %v397 = vld [vmem:[%s2] sm:$0x1]
      %v399 = vperm.slane %v397, 0
      %v407 = vunpack.c.l.b16 %v343
      %v408 = vunpack.c.h.b16 %v343
      %v409 = vunpack.c.l.b16 %v344
      %v410 = vunpack.c.l.b16 %v345
      %v411 = vunpack.c.h.b16 %v345
      %v412 = vunpack.c.l.b16 %v346
      %v413 = vunpack.c.l.b16 %v347
      %v414 = vunpack.c.h.b16 %v347
      %v415 = vunpack.c.l.b16 %v348
      %v416 = vpack.c.b16 %v410, %v407
      %v417 = vpack.c.b16 %v411, %v408
      %v418 = vpack.c.b16 %v412, %v409
      %v419 = vpack.c.b16 %v413, %v413
      %v420 = vpack.c.b16 %v414, %v414
      %v421 = vpack.c.b16 %v415, %v415
      %v476 = vunpack.c.l.b16 %v349
      %v477 = vunpack.c.l.b16 %v350
      %v478 = vunpack.c.l.b16 %v351
      %v479 = vunpack.c.l.b16 %v352
      %v480 = vunpack.c.l.b16 %v353
      %v481 = vunpack.c.l.b16 %v354
      %v482 = vunpack.c.l.b16 %v355
      %v483 = vunpack.c.l.b16 %v356
      %v484 = vunpack.c.l.b16 %v357
      %v485 = vunpack.c.l.b16 %v358
      %v486 = vunpack.c.l.b16 %v359
      %v487 = vunpack.c.l.b16 %v360
      %v488 = vunpack.c.l.b16 %v361
      %v489 = vunpack.c.l.b16 %v362
      %v490 = vunpack.c.l.b16 %v363
      %v491 = vunpack.c.l.b16 %v364
      %v492 = vunpack.c.l.b16 %v365
      %v493 = vunpack.c.l.b16 %v366
      %v494 = vunpack.c.l.b16 %v367
      %v495 = vunpack.c.l.b16 %v368
      %v496 = vunpack.c.l.b16 %v369
      %v497 = vunpack.c.l.b16 %v370
      %v498 = vunpack.c.l.b16 %v371
      %v499 = vunpack.c.l.b16 %v372
      %v500 = vunpack.c.l.b16 %v373
      %v501 = vunpack.c.l.b16 %v374
      %v502 = vunpack.c.l.b16 %v375
      %v503 = vunpack.c.l.b16 %v376
      %v504 = vunpack.c.l.b16 %v377
      %v505 = vunpack.c.l.b16 %v378
      %v506 = vunpack.c.l.b16 %v379
      %v507 = vunpack.c.l.b16 %v380
      %v508 = vunpack.c.l.b16 %v381
      %v509 = vunpack.c.l.b16 %v382
      %v510 = vunpack.c.l.b16 %v383
      %v511 = vunpack.c.l.b16 %v384
      %v512 = vunpack.c.l.b16 %v385
      %v513 = vunpack.c.l.b16 %v386
      %v514 = vunpack.c.l.b16 %v387
      %v515 = vunpack.c.l.b16 %v388
      %v516 = vunpack.c.l.b16 %v389
      %v517 = vunpack.c.l.b16 %v390
      %v518 = vunpack.c.l.b16 %v391
      %v519 = vunpack.c.l.b16 %v392
      %v520 = vunpack.c.l.b16 %v393
      %v521 = vunpack.c.l.b16 %v394
      %v522 = vunpack.c.l.b16 %v395
      %v523 = vunpack.c.l.b16 %v396
      %v524 = vpack.c.b16 %v477, %v476
      %v525 = vpack.c.b16 %v479, %v478
      %v526 = vpack.c.b16 %v481, %v480
      %v527 = vpack.c.b16 %v483, %v482
      %v528 = vpack.c.b16 %v485, %v484
      %v529 = vpack.c.b16 %v487, %v486
      %v530 = vpack.c.b16 %v489, %v488
      %v531 = vpack.c.b16 %v491, %v490
      %v532 = vpack.c.b16 %v493, %v492
      %v533 = vpack.c.b16 %v495, %v494
      %v534 = vpack.c.b16 %v497, %v496
      %v535 = vpack.c.b16 %v499, %v498
      %v536 = vpack.c.b16 %v501, %v500
      %v537 = vpack.c.b16 %v503, %v502
      %v538 = vpack.c.b16 %v505, %v504
      %v539 = vpack.c.b16 %v507, %v506
      %v540 = vpack.c.b16 %v509, %v508
      %v541 = vpack.c.b16 %v511, %v510
      %v542 = vpack.c.b16 %v513, %v512
      %v543 = vpack.c.b16 %v515, %v514
      %v544 = vpack.c.b16 %v517, %v516
      %v545 = vpack.c.b16 %v519, %v518
      %v546 = vpack.c.b16 %v521, %v520
      %v547 = vpack.c.b16 %v523, %v522
      %572 = vmatpush.bf16.msra.mxu0 %v531
      %573 = vmatpush.bf16.msra.mxu0 %v530
      %574 = vmatpush.bf16.msra.mxu0 %v529
      %575 = vmatpush.bf16.msra.mxu0 %v528
      %576 = vmatpush.bf16.msra.mxu0 %v527
      %577 = vmatpush.bf16.msra.mxu0 %v526
      %578 = vmatpush.bf16.msra.mxu0 %v525
      %579 = vmatpush.bf16.msra.mxu0 %v524
      %580 = vmatmul.bf16.gmra.mxu0 %v416
      %v581 = vpop.f32.mrf.mxu0
      %v582 = vadd.f32 %v399, %v581
      %v583 = vpop.f32.mrf.mxu0
      %v584 = vadd.f32 %v399, %v583
      %585 = vmatmul.bf16.gmra.mxu0 %v419
      %v586 = vpop.f32.mrf.mxu0
      %v587 = vadd.f32 %v399, %v586
      %v588 = vpop.f32.mrf.mxu0
      %589 = vdwg.mxu0
      %590 = vmatpush.bf16.msra.mxu0 %v539
      %591 = vmatpush.bf16.msra.mxu0 %v538
      %592 = vmatpush.bf16.msra.mxu0 %v537
      %593 = vmatpush.bf16.msra.mxu0 %v536
      %594 = vmatpush.bf16.msra.mxu0 %v535
      %595 = vmatpush.bf16.msra.mxu0 %v534
      %596 = vmatpush.bf16.msra.mxu0 %v533
      %597 = vmatpush.bf16.msra.mxu0 %v532
      %598 = vmatmul.bf16.gmra.mxu0 %v417
      %v599 = vpop.f32.mrf.mxu0
      %v600 = vadd.f32 %v582, %v599
      %v601 = vpop.f32.mrf.mxu0
      %v602 = vadd.f32 %v584, %v601
      %603 = vmatmul.bf16.gmra.mxu0 %v420
      %v604 = vpop.f32.mrf.mxu0
      %v605 = vadd.f32 %v587, %v604
      %v606 = vpop.f32.mrf.mxu0
      %607 = vdwg.mxu0
      %608 = vmatpush.bf16.msra.mxu0 %v547
      %609 = vmatpush.bf16.msra.mxu0 %v546
      %610 = vmatpush.bf16.msra.mxu0 %v545
      %611 = vmatpush.bf16.msra.mxu0 %v544
      %612 = vmatpush.bf16.msra.mxu0 %v543
      %613 = vmatpush.bf16.msra.mxu0 %v542
      %614 = vmatpush.bf16.msra.mxu0 %v541
      %615 = vmatpush.bf16.msra.mxu0 %v540
      %616 = vmatmul.bf16.gmra.mxu0 %v418
      %v617 = vpop.f32.mrf.mxu0
      %v618 = vadd.f32 %v600, %v617
      %v619 = vpop.f32.mrf.mxu0
      %v620 = vadd.f32 %v602, %v619
      %621 = vmatmul.bf16.gmra.mxu0 %v421
      %v622 = vpop.f32.mrf.mxu0
      %v623 = vadd.f32 %v605, %v622
      %v624 = vpop.f32.mrf.mxu0
      %625 = vdwg.mxu0
      %v626 = vmax.f32 %v618, 0.0
      %v627 = vmax.f32 %v620, 0.0
      %v628 = vmax.f32 %v623, 0.0
      %v629 = vlaneseq
      %v630 = vshrl.u32 %v629, 7
      %v631 = vadd.s32 %v630, 8
      %v632 = vadd.s32 %v630, 16
      %s633 = ssub.s32 %s249, 1
      %v634 = vstv %s633
      %v635 = vadd.s32 %v630, %v634
      %v636 = vadd.s32 %v631, %v634
      %v637 = vadd.s32 %v632, %v634
      %vm638 = vcmp.ge.s32.totalorder %v635, 0
      %vm639 = vcmp.ge.s32.totalorder %v636, 0
      %vm640 = vcmp.ge.s32.totalorder %v637, 0
      %vm641 = vcmp.lt.s32.totalorder %v635, 16
      %vm642 = vcmp.lt.s32.totalorder %v636, 16
      %vm643 = vcmp.lt.s32.totalorder %v637, 16
      %vm644 = vmand %vm638, %vm641
      %vm645 = vmand %vm639, %vm642
      %vm646 = vmand %vm640, %vm643
      %v647 = vsel %vm644, 1, 0
      %v648 = vsel %vm645, 1, 0
      %v649 = vsel %vm646, 1, 0
      %vm650 = vcmp.eq.s32.totalorder %v647, 1
      %vm651 = vcmp.eq.s32.totalorder %v648, 1
      %vm652 = vcmp.eq.s32.totalorder %v649, 1
      %v653 = vsel %vm650, %v626, 0.0
      %v654 = vsel %vm651, %v627, 0.0
      %v655 = vsel %vm652, %v628, 0.0
      %v656 = vpack.c.bf16 %v653, %v653
      %v657 = vpack.c.bf16 %v654, %v654
      %v658 = vpack.c.bf16 %v655, %v655
      %659 = vst [vmem:[#allocation3] sm:$0xf] %v656
      %660 = vst [vmem:[#allocation3 + $0x4] sm:$0xf] %v657
      %661 = vst [vmem:[#allocation3 + $0x8] sm:$0x1] %v658
      %v662 = vld [vmem:[#allocation3] sm:$0xf]
      %v663 = vld [vmem:[#allocation3 + $0x4] sm:$0xf]
      %664 = vst [vmem:[#allocation4] sm:$0xf] %v662
      %665 = vst [vmem:[#allocation4 + $0xc] sm:$0xf] %v663
      %v666 = vld [vmem:[#allocation3] sm:$0xf]
      %v667 = vld [vmem:[#allocation3 + $0x4] sm:$0xf]
      %v668 = vld [vmem:[#allocation3 + $0x8] sm:$0x1]
      %v670 = vshrl.u32 %v666, 16
      %v672 = vrot.slane %v670, 4
      %v673 = vshll.u32 %v666, 16
      %v675 = vrot.slane %v673, 5
      %v676 = vor.u32 %v672, %v675
      %v677 = vrot.slane %v676, 4
      %v679 = vshll.u32 %v667, 16
      %v681 = vrot.slane %v679, 5
      %v682 = vsel %vm284, %v677, %v681
      %v683 = vshrl.u32 %v667, 16
      %v685 = vrot.slane %v683, 4
      %v686 = vor.u32 %v685, %v681
      %v687 = vrot.slane %v686, 4
      %v689 = vshll.u32 %v668, 16
      %v691 = vrot.slane %v689, 5
      %v692 = vsel %vm284, %v687, %v691
      %695 = vst [vmem:[#allocation4 + $0x4] sm:$0xf] %v682
      %696 = vst [vmem:[#allocation4 + $0x10] sm:$0xf] %v692
      %v697 = vld [vmem:[#allocation3] sm:$0xe]
      %v698 = vld [vmem:[#allocation3 + $0x4] sm:$0xf]
      %v699 = vld [vmem:[#allocation3 + $0x8] sm:$0x1]
      %v703 = vrot.slane %v697, 5
      %v704 = vrot.slane %v703, 4
      %v705 = vrot.slane %v698, 5
      %v706 = vsel %vm328, %v704, %v705
      %v707 = vrot.slane %v705, 4
      %v708 = vrot.slane %v699, 5
      %v709 = vsel %vm328, %v707, %v708
      %712 = vst [vmem:[#allocation4 + $0x8] sm:$0xf] %v706
      %713 = vst [vmem:[#allocation4 + $0x14] sm:$0xf] %v709
      %v714 = vld [vmem:[#allocation4] sm:$0xff]
      %v715 = vld [vmem:[#allocation4 + $0x8] sm:$0xf]
      %v716 = vld [vmem:[#allocation4 + $0xc] sm:$0xff]
      %v717 = vld [vmem:[#allocation4 + $0x14] sm:$0xf]
      %v718 = vld [vmem:[%s3] sm:$0xf]
      %v719 = vld [vmem:[%s3 + $0x4] sm:$0xf]
      %v720 = vld [vmem:[%s3 + $0x8] sm:$0xf]
      %v721 = vld [vmem:[%s3 + $0xc] sm:$0xf]
      %v722 = vld [vmem:[%s3 + $0x10] sm:$0xf]
      %v723 = vld [vmem:[%s3 + $0x14] sm:$0xf]
      %v724 = vld [vmem:[%s3 + $0x18] sm:$0xf]
      %v725 = vld [vmem:[%s3 + $0x1c] sm:$0xf]
      %v726 = vld [vmem:[%s3 + $0x20] sm:$0xf]
      %v727 = vld [vmem:[%s3 + $0x24] sm:$0xf]
      %v728 = vld [vmem:[%s3 + $0x28] sm:$0xf]
      %v729 = vld [vmem:[%s3 + $0x2c] sm:$0xf]
      %v730 = vld [vmem:[%s3 + $0x30] sm:$0xf]
      %v731 = vld [vmem:[%s3 + $0x34] sm:$0xf]
      %v732 = vld [vmem:[%s3 + $0x38] sm:$0xf]
      %v733 = vld [vmem:[%s3 + $0x3c] sm:$0xf]
      %v734 = vld [vmem:[%s3 + $0x40] sm:$0xf]
      %v735 = vld [vmem:[%s3 + $0x44] sm:$0xf]
      %v736 = vld [vmem:[%s3 + $0x48] sm:$0xf]
      %v737 = vld [vmem:[%s3 + $0x4c] sm:$0xf]
      %v738 = vld [vmem:[%s3 + $0x50] sm:$0xf]
      %v739 = vld [vmem:[%s3 + $0x54] sm:$0xf]
      %v740 = vld [vmem:[%s3 + $0x58] sm:$0xf]
      %v741 = vld [vmem:[%s3 + $0x5c] sm:$0xf]
      %v742 = vld [vmem:[%s3 + $0x60] sm:$0xf]
      %v743 = vld [vmem:[%s3 + $0x64] sm:$0xf]
      %v744 = vld [vmem:[%s3 + $0x68] sm:$0xf]
      %v745 = vld [vmem:[%s3 + $0x6c] sm:$0xf]
      %v746 = vld [vmem:[%s3 + $0x70] sm:$0xf]
      %v747 = vld [vmem:[%s3 + $0x74] sm:$0xf]
      %v748 = vld [vmem:[%s3 + $0x78] sm:$0xf]
      %v749 = vld [vmem:[%s3 + $0x7c] sm:$0xf]
      %v750 = vld [vmem:[%s3 + $0x80] sm:$0xf]
      %v751 = vld [vmem:[%s3 + $0x84] sm:$0xf]
      %v752 = vld [vmem:[%s3 + $0x88] sm:$0xf]
      %v753 = vld [vmem:[%s3 + $0x8c] sm:$0xf]
      %v754 = vld [vmem:[%s3 + $0x90] sm:$0xf]
      %v755 = vld [vmem:[%s3 + $0x94] sm:$0xf]
      %v756 = vld [vmem:[%s3 + $0x98] sm:$0xf]
      %v757 = vld [vmem:[%s3 + $0x9c] sm:$0xf]
      %v758 = vld [vmem:[%s3 + $0xa0] sm:$0xf]
      %v759 = vld [vmem:[%s3 + $0xa4] sm:$0xf]
      %v760 = vld [vmem:[%s3 + $0xa8] sm:$0xf]
      %v761 = vld [vmem:[%s3 + $0xac] sm:$0xf]
      %v762 = vld [vmem:[%s3 + $0xb0] sm:$0xf]
      %v763 = vld [vmem:[%s3 + $0xb4] sm:$0xf]
      %v764 = vld [vmem:[%s3 + $0xb8] sm:$0xf]
      %v765 = vld [vmem:[%s3 + $0xbc] sm:$0xf]
      %v766 = vld [vmem:[%s250] sm:$0xff]
      %v767 = vld [vmem:[%s250 + $0x8] sm:$0xff]
      %v768 = vld [vmem:[%s4] sm:$0x1]
      %v770 = vperm.slane %v768, 0
      %v776 = vunpack.c.l.b16 %v714
      %v777 = vunpack.c.h.b16 %v714
      %v778 = vunpack.c.l.b16 %v715
      %v779 = vunpack.c.l.b16 %v716
      %v780 = vunpack.c.h.b16 %v716
      %v781 = vunpack.c.l.b16 %v717
      %v782 = vpack.c.b16 %v779, %v776
      %v783 = vpack.c.b16 %v780, %v777
      %v784 = vpack.c.b16 %v781, %v778
      %v836 = vunpack.c.l.b16 %v718
      %v837 = vunpack.c.l.b16 %v719
      %v838 = vunpack.c.l.b16 %v720
      %v839 = vunpack.c.l.b16 %v721
      %v840 = vunpack.c.l.b16 %v722
      %v841 = vunpack.c.l.b16 %v723
      %v842 = vunpack.c.l.b16 %v724
      %v843 = vunpack.c.l.b16 %v725
      %v844 = vunpack.c.l.b16 %v726
      %v845 = vunpack.c.l.b16 %v727
      %v846 = vunpack.c.l.b16 %v728
      %v847 = vunpack.c.l.b16 %v729
      %v848 = vunpack.c.l.b16 %v730
      %v849 = vunpack.c.l.b16 %v731
      %v850 = vunpack.c.l.b16 %v732
      %v851 = vunpack.c.l.b16 %v733
      %v852 = vunpack.c.l.b16 %v734
      %v853 = vunpack.c.l.b16 %v735
      %v854 = vunpack.c.l.b16 %v736
      %v855 = vunpack.c.l.b16 %v737
      %v856 = vunpack.c.l.b16 %v738
      %v857 = vunpack.c.l.b16 %v739
      %v858 = vunpack.c.l.b16 %v740
      %v859 = vunpack.c.l.b16 %v741
      %v860 = vunpack.c.l.b16 %v742
      %v861 = vunpack.c.l.b16 %v743
      %v862 = vunpack.c.l.b16 %v744
      %v863 = vunpack.c.l.b16 %v745
      %v864 = vunpack.c.l.b16 %v746
      %v865 = vunpack.c.l.b16 %v747
      %v866 = vunpack.c.l.b16 %v748
      %v867 = vunpack.c.l.b16 %v749
      %v868 = vunpack.c.l.b16 %v750
      %v869 = vunpack.c.l.b16 %v751
      %v870 = vunpack.c.l.b16 %v752
      %v871 = vunpack.c.l.b16 %v753
      %v872 = vunpack.c.l.b16 %v754
      %v873 = vunpack.c.l.b16 %v755
      %v874 = vunpack.c.l.b16 %v756
      %v875 = vunpack.c.l.b16 %v757
      %v876 = vunpack.c.l.b16 %v758
      %v877 = vunpack.c.l.b16 %v759
      %v878 = vunpack.c.l.b16 %v760
      %v879 = vunpack.c.l.b16 %v761
      %v880 = vunpack.c.l.b16 %v762
      %v881 = vunpack.c.l.b16 %v763
      %v882 = vunpack.c.l.b16 %v764
      %v883 = vunpack.c.l.b16 %v765
      %v884 = vpack.c.b16 %v837, %v836
      %v885 = vpack.c.b16 %v839, %v838
      %v886 = vpack.c.b16 %v841, %v840
      %v887 = vpack.c.b16 %v843, %v842
      %v888 = vpack.c.b16 %v845, %v844
      %v889 = vpack.c.b16 %v847, %v846
      %v890 = vpack.c.b16 %v849, %v848
      %v891 = vpack.c.b16 %v851, %v850
      %v892 = vpack.c.b16 %v853, %v852
      %v893 = vpack.c.b16 %v855, %v854
      %v894 = vpack.c.b16 %v857, %v856
      %v895 = vpack.c.b16 %v859, %v858
      %v896 = vpack.c.b16 %v861, %v860
      %v897 = vpack.c.b16 %v863, %v862
      %v898 = vpack.c.b16 %v865, %v864
      %v899 = vpack.c.b16 %v867, %v866
      %v900 = vpack.c.b16 %v869, %v868
      %v901 = vpack.c.b16 %v871, %v870
      %v902 = vpack.c.b16 %v873, %v872
      %v903 = vpack.c.b16 %v875, %v874
      %v904 = vpack.c.b16 %v877, %v876
      %v905 = vpack.c.b16 %v879, %v878
      %v906 = vpack.c.b16 %v881, %v880
      %v907 = vpack.c.b16 %v883, %v882
      %932 = vmatpush.bf16.msra.mxu0 %v891
      %933 = vmatpush.bf16.msra.mxu0 %v890
      %934 = vmatpush.bf16.msra.mxu0 %v889
      %935 = vmatpush.bf16.msra.mxu0 %v888
      %936 = vmatpush.bf16.msra.mxu0 %v887
      %937 = vmatpush.bf16.msra.mxu0 %v886
      %938 = vmatpush.bf16.msra.mxu0 %v885
      %939 = vmatpush.bf16.msra.mxu0 %v884
      %940 = vmatmul.bf16.gmra.mxu0 %v782
      %v941 = vpop.f32.mrf.mxu0
      %v942 = vadd.f32 %v770, %v941
      %v943 = vpop.f32.mrf.mxu0
      %v944 = vadd.f32 %v770, %v943
      %945 = vdwg.mxu0
      %946 = vmatpush.bf16.msra.mxu0 %v899
      %947 = vmatpush.bf16.msra.mxu0 %v898
      %948 = vmatpush.bf16.msra.mxu0 %v897
      %949 = vmatpush.bf16.msra.mxu0 %v896
      %950 = vmatpush.bf16.msra.mxu0 %v895
      %951 = vmatpush.bf16.msra.mxu0 %v894
      %952 = vmatpush.bf16.msra.mxu0 %v893
      %953 = vmatpush.bf16.msra.mxu0 %v892
      %954 = vmatmul.bf16.gmra.mxu0 %v783
      %v955 = vpop.f32.mrf.mxu0
      %v956 = vadd.f32 %v942, %v955
      %v957 = vpop.f32.mrf.mxu0
      %v958 = vadd.f32 %v944, %v957
      %959 = vdwg.mxu0
      %960 = vmatpush.bf16.msra.mxu0 %v907
      %961 = vmatpush.bf16.msra.mxu0 %v906
      %962 = vmatpush.bf16.msra.mxu0 %v905
      %963 = vmatpush.bf16.msra.mxu0 %v904
      %964 = vmatpush.bf16.msra.mxu0 %v903
      %965 = vmatpush.bf16.msra.mxu0 %v902
      %966 = vmatpush.bf16.msra.mxu0 %v901
      %967 = vmatpush.bf16.msra.mxu0 %v900
      %968 = vmatmul.bf16.gmra.mxu0 %v784
      %v969 = vpop.f32.mrf.mxu0
      %v970 = vadd.f32 %v956, %v969
      %v971 = vpop.f32.mrf.mxu0
      %v972 = vadd.f32 %v958, %v971
      %973 = vdwg.mxu0
      %v974 = vadd.f32 %v970, %v766
      %v975 = vadd.f32 %v972, %v767
      %976 = vst [vmem:[%s246] sm:$0xff] %v974
      %977 = vst [vmem:[%s246 + $0x8] sm:$0xff] %v975
      %s978 = smul.u32 2, %s21
      %p979 = scmp.lt.s32.totalorder %s20, 1
      %s980 = scalar_select %p979, %s20, 1
      %p981 = scmp.lt.s32.totalorder %s978, 1
      %s982 = scalar_select %p981, %s978, 1
      %s983 = smul.addr %s980, 2
      %s984 = sadd.s32 %s982, %s983
      %s985 = smul.addr %s984, 8
      %s986 = scalar_lea.vmem %s5, %s985
      // Predicated region
      $region41: #{rb_forward.1} parent=39 // pred_check
        %p987 = pneg %p158
      $region42: #{rb_forward.1} parent=39 // pred_check_branch
        %989 = sbr.rel (%p987) target = $region44
      $region43: #{rb_forward.1} parent=39 // pred_region
        %s990 = smul.u32 2, %s21
      $region44: #{rb_forward.1} parent=39 // pred_fallthru
        _
    $region40: #{rb_forward.1} parent=5 // pred_fallthru
      _
    %p991 = scmp.le.s32.totalorder 2, %s11
    // Predicated region
    $region45: #{rb_forward.1} parent=5 // pred_check
      %p992 = pneg %p991
    $region46: #{rb_forward.1} parent=5 // pred_check_branch
      %994 = sbr.rel (%p992) target = $region48
    $region47: #{rb_forward.1} parent=5 // pred_region
      %s995 = ssub.s32 %s11, 2
      // Predicated region
      $region49: #{rb_forward.1} parent=47 // pred_check
        %p996 = pneg %p164
      $region50: #{rb_forward.1} parent=47 // pred_check_branch
        %998 = sbr.rel (%p996) target = $region52
      $region51: #{rb_forward.1} parent=47 // pred_region
        %s999 = smul.u32 2, %s23
        %p1000 = scmp.lt.s32.totalorder %s22, 1
        %s1001 = scalar_select %p1000, %s22, 1
        %p1002 = scmp.lt.s32.totalorder %s999, 1
        %s1003 = scalar_select %p1002, %s999, 1
        %s1004 = smul.addr %s1001, 2
        %s1005 = sadd.s32 %s1003, %s1004
        %s1006 = smul.addr %s1005, 8
        %s1007 = scalar_lea.vmem %s5, %s1006
      $region52: #{rb_forward.1} parent=47 // pred_fallthru
        _
    $region48: #{rb_forward.1} parent=5 // pred_fallthru
      _
  $region6: #{rb_forward.1} parent=0 // loop_footer
    %s15 = sadd.s32 1, %s11
  $region7: #{rb_forward.1} parent=0 // loop_footer_branch
    %10 = sbr.rel target = $region3
  $region8: #{rb_forward.1} parent=0 // loop_exit
    _

// kernel: tile.13
$region0: #{tile.13}
  #allocation0 [shape = 's32[1]{0}', space=sflag, size = 0x4, scoped, tag = 'scoped memory for tile.13']
  %s0 = inlined_call_operand.vmem [shape: f32[8], index: 0, kind: input, shape index: {}]
  %s1 = inlined_call_operand.vmem [shape: f32[16,8], index: 1, kind: output, shape index: {}]
  // Predicated region
  $region2: #{tile.13} parent=0 // pred_check
    _
  $region3: #{tile.13} parent=0 // pred_check_branch
    %3 = sbr.rel (0) target = $region5
  $region4: #{tile.13} parent=0 // pred_region
    _
  $region5: #{tile.13} parent=0 // pred_fallthru
    _
  %v4 = vld [vmem:[%s0] ss:$0 sm:$0xff]
  %5 = vst [vmem:[%s1] sm:$0xff] %v4
  %s6 = scalar_lea.vmem %s1, 8
  %7 = vst [vmem:[%s6] sm:$0xff] %v4

// kernel: tile.14
$region0: #{tile.14}
  %s0 = inlined_call_operand.vmem [shape: f32[16,8], index: 0, kind: input, shape index: {}]
  %s1 = inlined_call_operand.vmem [shape: f32[1,128], index: 1, kind: output, shape index: {}]
  $region1: #{tile.14} parent=0
    #allocation0 [shape = 'u8[4096]{0}', space=vmem, size = 0x1000, scoped, tag = 'scoped mem for output reshape']
    %v2 = vld [vmem:[%s0] sm:$0x1]
    %vm3 = vcmask 64512
    %4 = vst.msk [vmem:[#allocation0] sm:$0x1] %vm3, %v2
    %s5 = scalar_lea.vmem %s0, 15
    %v6 = vld [vmem:[%s5] sm:$0x1]
    %7 = vrot.lane.b32.xlu0 %v6, 120
    %v8 = vpop.permute.xlu0 %7
    %vm9 = vcmask 1048512
    %10 = vst.msk [vmem:[#allocation0] sm:$0x1] %vm9, %v8
    %s11 = scalar_lea.vmem %s0, 14
    %v12 = vld [vmem:[%s11] sm:$0x1]
    %13 = vrot.lane.b32.xlu0 %v12, 112
    %v14 = vpop.permute.xlu0 %13
    %vm15 = vcmask 982912
    %16 = vst.msk [vmem:[#allocation0] sm:$0x1] %vm15, %v14
    %s17 = scalar_lea.vmem %s0, 13
    %v18 = vld [vmem:[%s17] sm:$0x1]
    %19 = vrot.lane.b32.xlu0 %v18, 104
    %v20 = vpop.permute.xlu0 %19
    %vm21 = vcmask 917312
    %22 = vst.msk [vmem:[#allocation0] sm:$0x1] %vm21, %v20
    %s23 = scalar_lea.vmem %s0, 12
    %v24 = vld [vmem:[%s23] sm:$0x1]
    %25 = vrot.lane.b32.xlu0 %v24, 96
    %v26 = vpop.permute.xlu0 %25
    %vm27 = vcmask 851712
    %28 = vst.msk [vmem:[#allocation0] sm:$0x1] %vm27, %v26
    %s29 = scalar_lea.vmem %s0, 11
    %v30 = vld [vmem:[%s29] sm:$0x1]
    %31 = vrot.lane.b32.xlu0 %v30, 88
    %v32 = vpop.permute.xlu0 %31
    %vm33 = vcmask 786112
    %34 = vst.msk [vmem:[#allocation0] sm:$0x1] %vm33, %v32
    %s35 = scalar_lea.vmem %s0, 10
    %v36 = vld [vmem:[%s35] sm:$0x1]
    %37 = vrot.lane.b32.xlu0 %v36, 80
    %v38 = vpop.permute.xlu0 %37
    %vm39 = vcmask 720512
    %40 = vst.msk [vmem:[#allocation0] sm:$0x1] %vm39, %v38
    %s41 = scalar_lea.vmem %s0, 9
    %v42 = vld [vmem:[%s41] sm:$0x1]
    %43 = vrot.lane.b32.xlu0 %v42, 72
    %v44 = vpop.permute.xlu0 %43
    %vm45 = vcmask 654912
    %46 = vst.msk [vmem:[#allocation0] sm:$0x1] %vm45, %v44
    %s47 = scalar_lea.vmem %s0, 8
    %v48 = vld [vmem:[%s47] sm:$0x1]
    %49 = vrot.lane.b32.xlu0 %v48, 64
    %v50 = vpop.permute.xlu0 %49
    %vm51 = vcmask 589312
    %52 = vst.msk [vmem:[#allocation0] sm:$0x1] %vm51, %v50
    %s53 = scalar_lea.vmem %s0, 7
    %v54 = vld [vmem:[%s53] sm:$0x1]
    %55 = vrot.lane.b32.xlu0 %v54, 56
    %v56 = vpop.permute.xlu0 %55
    %vm57 = vcmask 523712
    %58 = vst.msk [vmem:[#allocation0] sm:$0x1] %vm57, %v56
    %s59 = scalar_lea.vmem %s0, 6
    %v60 = vld [vmem:[%s59] sm:$0x1]
    %61 = vrot.lane.b32.xlu0 %v60, 48
    %v62 = vpop.permute.xlu0 %61
    %vm63 = vcmask 458112
    %64 = vst.msk [vmem:[#allocation0] sm:$0x1] %vm63, %v62
    %s65 = scalar_lea.vmem %s0, 5
    %v66 = vld [vmem:[%s65] sm:$0x1]
    %67 = vrot.lane.b32.xlu0 %v66, 40
    %v68 = vpop.permute.xlu0 %67
    %vm69 = vcmask 392512
    %70 = vst.msk [vmem:[#allocation0] sm:$0x1] %vm69, %v68
    %s71 = scalar_lea.vmem %s0, 4
    %v72 = vld [vmem:[%s71] sm:$0x1]
    %73 = vrot.lane.b32.xlu0 %v72, 32
    %v74 = vpop.permute.xlu0 %73
    %vm75 = vcmask 326912
    %76 = vst.msk [vmem:[#allocation0] sm:$0x1] %vm75, %v74
    %s77 = scalar_lea.vmem %s0, 3
    %v78 = vld [vmem:[%s77] sm:$0x1]
    %79 = vrot.lane.b32.xlu0 %v78, 24
    %v80 = vpop.permute.xlu0 %79
    %vm81 = vcmask 261312
    %82 = vst.msk [vmem:[#allocation0] sm:$0x1] %vm81, %v80
    %s83 = scalar_lea.vmem %s0, 2
    %v84 = vld [vmem:[%s83] sm:$0x1]
    %85 = vrot.lane.b32.xlu0 %v84, 16
    %v86 = vpop.permute.xlu0 %85
    %vm87 = vcmask 195712
    %88 = vst.msk [vmem:[#allocation0] sm:$0x1] %vm87, %v86
    %s89 = scalar_lea.vmem %s0, 1
    %v90 = vld [vmem:[%s89] sm:$0x1]
    %91 = vrot.lane.b32.xlu0 %v90, 8
    %v92 = vpop.permute.xlu0 %91
    %vm93 = vcmask 130112
    %94 = vst.msk [vmem:[#allocation0] sm:$0x1] %vm93, %v92
    %s96 = ssub.s32 2, 1
    %v97 = vld [vmem:[#allocation0] sm:%s96]
    %s99 = ssub.s32 2, 1
    %100 = vst [vmem:[%s1] sm:%s99] %v97

// kernel: rb_forward.1
$region0: #{rb_forward.1}
  #allocation0 [shape = 'u32[]', space=smem, size = 0x4, offset = 0x4, fixed_abs, tag = 'smem constant byte address 0x4 - core index']
  #allocation1 [shape = 'u32[72,128]{1,0:T(1,128)}', space=vmem, size = 0x9000, scoped, tag = 'internal scratch']
  #allocation2 [shape = 'bf16[20,128]{1,0:T(8,128)(2,1)}', space=vmem, size = 0x1800, scoped, tag = 'scratch operand']
  #allocation3 [shape = 'bf16[18,128]{1,0:T(8,128)(2,1)}', space=vmem, size = 0x1800, scoped, tag = 'scratch operand']
  #allocation4 [shape = 'bf16[18,384]{1,0:T(8,128)(2,1)}', space=vmem, size = 0x4800, scoped, tag = 'scratch operand']
  %s0 = inlined_call_operand.vmem [shape: f32[2,16,128], index: 0, kind: input, shape index: {}]
  %s1 = inlined_call_operand.vmem [shape: bf16[384,128], index: 1, kind: input, shape index: {}]
  %s2 = inlined_call_operand.vmem [shape: f32[1,128], index: 2, kind: input, shape index: {}]
  %s3 = inlined_call_operand.vmem [shape: bf16[384,128], index: 3, kind: input, shape index: {}]
  %s4 = inlined_call_operand.vmem [shape: f32[1,128], index: 4, kind: input, shape index: {}]
  %s5 = inlined_call_operand.vmem [shape: f32[2,16,128], index: 5, kind: output, shape index: {}]
  %s6 = sld [smem:[#allocation0]]
  $region53: #{rb_forward.1} parent=0
    _
  %s8 = ssub.s32 1, %s6
  %s9 = scalar_select 0, %s8, %s6
  loop: start=0, step=1, limit=4
  $region2: #{rb_forward.1} parent=0 // loop_pre_header
    _
  $region3: #{rb_forward.1} parent=0 // loop_header
    %s11 = sphi 0, %s15
    %p12 = scmp.ge.s32.totalorder %s11, 4
    %s18 = sphi 0, %s30
    %s19 = sphi 0, %s26
    %s20 = sphi 0, %s18
    %s21 = sphi 0, %s19
    %s22 = sphi 0, %s20
    %s23 = sphi 0, %s21
    %s33 = sphi 0, %s35
    %s36 = sphi 0, %s33
    %s37 = sphi 0, %s36
    %s53 = sphi 0, %s37
    %s57 = sphi 0, %s57
    %s59 = sphi 0, %s57
    %s60 = sphi 0, %s59
    %s74 = sphi 0, %s60
    %s78 = sphi 0, %s78
    %s80 = sphi 0, %s78
    %s81 = sphi 0, %s80
    %s95 = sphi 0, %s81
    %s99 = sphi 0, %s99
    %s101 = sphi 0, %s99
    %s102 = sphi 0, %s101
    %s116 = sphi 0, %s102
    %s120 = sphi 0, %s120
    %s122 = sphi 0, %s120
    %s123 = sphi 0, %s122
    %s137 = sphi 0, %s123
    %s145 = sphi 0, %s147
    %s148 = sphi 0, %s145
    %s149 = sphi 0, %s148
    %s165 = sphi 0, %s149
  $region4: #{rb_forward.1} parent=0 // loop_header_branch
    %14 = sbr.rel (%p12) target = $region8
  $region5: #{rb_forward.1} parent=0 // loop_body
    %s16 = ssub.s32 %s11, 1
    %s17 = ssub.s32 %s11, 2
    %s24 = sadd.s32 1, %s19
    %p25 = scmp.ge.s32.totalorder %s24, 1
    %s26 = scalar_select %p25, 0, %s24
    %s27 = sadd.s32 1, %s18
    %s28 = scalar_select %p25, %s27, %s18
    %p29 = scmp.ge.s32.totalorder %s28, 2
    %s30 = scalar_select %p29, 0, %s28
    %s31 = ssub.s32 %s18, %s30
    %p32 = scmp.eq.s32.totalorder %s31, 0
    %s34 = sadd.s32 %s33, 1
    %s35 = scalar_select %p32, %s33, %s34
    %p38 = pneg %p32
    %p39 = scmp.eq.s32.totalorder %s11, 1
    %p40 = por %p38, %p39
    %p41 = scmp.ne.s32.totalorder %s33, %s36
    %p42 = scmp.eq.s32.totalorder %s11, 0
    %p43 = por %p41, %p42
    %p44 = scmp.ne.s32.totalorder %s33, %s36
    %p45 = scmp.eq.s32.totalorder %s16, 1
    %p46 = por %p44, %p45
    %p47 = scmp.ne.s32.totalorder %s36, %s37
    %p48 = scmp.eq.s32.totalorder %s16, 0
    %p49 = por %p47, %p48
    %p50 = scmp.ne.s32.totalorder %s36, %s37
    %p51 = scmp.eq.s32.totalorder %s17, 1
    %p52 = por %p50, %p51
    %p54 = scmp.ne.s32.totalorder %s37, %s53
    %p55 = scmp.eq.s32.totalorder %s17, 0
    %p56 = por %p54, %p55
    %s58 = sadd.s32 %s57, 1
    %p61 = scmp.eq.s32.totalorder %s11, 1
    %p62 = scmp.ne.s32.totalorder %s57, %s59
    %p63 = scmp.eq.s32.totalorder %s11, 0
    %p64 = por %p62, %p63
    %p65 = scmp.ne.s32.totalorder %s57, %s59
    %p66 = scmp.eq.s32.totalorder %s16, 1
    %p67 = por %p65, %p66
    %p68 = scmp.ne.s32.totalorder %s59, %s60
    %p69 = scmp.eq.s32.totalorder %s16, 0
    %p70 = por %p68, %p69
    %p71 = scmp.ne.s32.totalorder %s59, %s60
    %p72 = scmp.eq.s32.totalorder %s17, 1
    %p73 = por %p71, %p72
    %p75 = scmp.ne.s32.totalorder %s60, %s74
    %p76 = scmp.eq.s32.totalorder %s17, 0
    %p77 = por %p75, %p76
    %s79 = sadd.s32 %s78, 1
    %p82 = scmp.eq.s32.totalorder %s11, 1
    %p83 = scmp.ne.s32.totalorder %s78, %s80
    %p84 = scmp.eq.s32.totalorder %s11, 0
    %p85 = por %p83, %p84
    %p86 = scmp.ne.s32.totalorder %s78, %s80
    %p87 = scmp.eq.s32.totalorder %s16, 1
    %p88 = por %p86, %p87
    %p89 = scmp.ne.s32.totalorder %s80, %s81
    %p90 = scmp.eq.s32.totalorder %s16, 0
    %p91 = por %p89, %p90
    %p92 = scmp.ne.s32.totalorder %s80, %s81
    %p93 = scmp.eq.s32.totalorder %s17, 1
    %p94 = por %p92, %p93
    %p96 = scmp.ne.s32.totalorder %s81, %s95
    %p97 = scmp.eq.s32.totalorder %s17, 0
    %p98 = por %p96, %p97
    %s100 = sadd.s32 %s99, 1
    %p103 = scmp.eq.s32.totalorder %s11, 1
    %p104 = scmp.ne.s32.totalorder %s99, %s101
    %p105 = scmp.eq.s32.totalorder %s11, 0
    %p106 = por %p104, %p105
    %p107 = scmp.ne.s32.totalorder %s99, %s101
    %p108 = scmp.eq.s32.totalorder %s16, 1
    %p109 = por %p107, %p108
    %p110 = scmp.ne.s32.totalorder %s101, %s102
    %p111 = scmp.eq.s32.totalorder %s16, 0
    %p112 = por %p110, %p111
    %p113 = scmp.ne.s32.totalorder %s101, %s102
    %p114 = scmp.eq.s32.totalorder %s17, 1
    %p115 = por %p113, %p114
    %p117 = scmp.ne.s32.totalorder %s102, %s116
    %p118 = scmp.eq.s32.totalorder %s17, 0
    %p119 = por %p117, %p118
    %s121 = sadd.s32 %s120, 1
    %p124 = scmp.eq.s32.totalorder %s11, 1
    %p125 = scmp.ne.s32.totalorder %s120, %s122
    %p126 = scmp.eq.s32.totalorder %s11, 0
    %p127 = por %p125, %p126
    %p128 = scmp.ne.s32.totalorder %s120, %s122
    %p129 = scmp.eq.s32.totalorder %s16, 1
    %p130 = por %p128, %p129
    %p131 = scmp.ne.s32.totalorder %s122, %s123
    %p132 = scmp.eq.s32.totalorder %s16, 0
    %p133 = por %p131, %p132
    %p134 = scmp.ne.s32.totalorder %s122, %s123
    %p135 = scmp.eq.s32.totalorder %s17, 1
    %p136 = por %p134, %p135
    %p138 = scmp.ne.s32.totalorder %s123, %s137
    %p139 = scmp.eq.s32.totalorder %s17, 0
    %p140 = por %p138, %p139
    %s141 = ssub.s32 %s18, %s30
    %s142 = ssub.s32 %s19, %s26
    %s143 = sor.u32 %s141, %s142
    %p144 = scmp.eq.s32.totalorder %s143, 0
    %s146 = sadd.s32 %s145, 1
    %s147 = scalar_select %p144, %s145, %s146
    %p150 = pneg %p144
    %p151 = scmp.eq.s32.totalorder %s11, 1
    %p152 = por %p150, %p151
    %p153 = scmp.ne.s32.totalorder %s145, %s148
    %p154 = scmp.eq.s32.totalorder %s11, 0
    %p155 = por %p153, %p154
    %p156 = scmp.ne.s32.totalorder %s145, %s148
    %p157 = scmp.eq.s32.totalorder %s16, 1
    %p158 = por %p156, %p157
    %p159 = scmp.ne.s32.totalorder %s148, %s149
    %p160 = scmp.eq.s32.totalorder %s16, 0
    %p161 = por %p159, %p160
    %p162 = scmp.ne.s32.totalorder %s148, %s149
    %p163 = scmp.eq.s32.totalorder %s17, 1
    %p164 = por %p162, %p163
    %p166 = scmp.ne.s32.totalorder %s149, %s165
    %p167 = scmp.eq.s32.totalorder %s17, 0
    %p168 = por %p166, %p167
    %p169 = scmp.le.s32.totalorder 1, %s11
    %p170 = scmp.lt.s32.totalorder %s11, 3
    %p171 = pnand %p169, %p170
    %p172 = pneg %p171
    // Predicated region
    $region9: #{rb_forward.1} parent=5 // pred_check
      _
    $region10: #{rb_forward.1} parent=5 // pred_check_branch
      %174 = sbr.rel (%p171) target = $region12
    $region11: #{rb_forward.1} parent=5 // pred_region
      %s175 = ssub.s32 %s11, 1
      // Predicated region
      $region13: #{rb_forward.1} parent=11 // pred_check
        %p176 = pneg %p70
      $region14: #{rb_forward.1} parent=11 // pred_check_branch
        %178 = sbr.rel (%p176) target = $region16
      $region15: #{rb_forward.1} parent=11 // pred_region
        _
      $region16: #{rb_forward.1} parent=11 // pred_fallthru
        _
      // Predicated region
      $region17: #{rb_forward.1} parent=11 // pred_check
        %p179 = pneg %p91
      $region18: #{rb_forward.1} parent=11 // pred_check_branch
        %181 = sbr.rel (%p179) target = $region20
      $region19: #{rb_forward.1} parent=11 // pred_region
        _
      $region20: #{rb_forward.1} parent=11 // pred_fallthru
        _
      // Predicated region
      $region21: #{rb_forward.1} parent=11 // pred_check
        %p182 = pneg %p112
      $region22: #{rb_forward.1} parent=11 // pred_check_branch
        %184 = sbr.rel (%p182) target = $region24
      $region23: #{rb_forward.1} parent=11 // pred_region
        _
      $region24: #{rb_forward.1} parent=11 // pred_fallthru
        _
      // Predicated region
      $region25: #{rb_forward.1} parent=11 // pred_check
        %p185 = pneg %p133
      $region26: #{rb_forward.1} parent=11 // pred_check_branch
        %187 = sbr.rel (%p185) target = $region28
      $region27: #{rb_forward.1} parent=11 // pred_region
        _
      $region28: #{rb_forward.1} parent=11 // pred_fallthru
        _
    $region12: #{rb_forward.1} parent=5 // pred_fallthru
      _
    %p188 = scmp.lt.s32.totalorder %s11, 2
    // Predicated region
    $region29: #{rb_forward.1} parent=5 // pred_check
      %p189 = pneg %p188
    $region30: #{rb_forward.1} parent=5 // pred_check_branch
      %191 = sbr.rel (%p189) target = $region32
    $region31: #{rb_forward.1} parent=5 // pred_region
      // Predicated region
      $region33: #{rb_forward.1} parent=31 // pred_check
        %p192 = pneg %p43
      $region34: #{rb_forward.1} parent=31 // pred_check_branch
        %194 = sbr.rel (%p192) target = $region36
      $region35: #{rb_forward.1} parent=31 // pred_region
        %p195 = scmp.lt.s32.totalorder %s18, 1
        %s196 = scalar_select %p195, %s18, 1
        %s197 = smul.addr %s196, 2
        %s198 = smul.addr %s197, 8
        %s199 = scalar_lea.vmem %s0, %s198
      $region36: #{rb_forward.1} parent=31 // pred_fallthru
        _
    $region32: #{rb_forward.1} parent=5 // pred_fallthru
      _
    %p200 = scmp.le.s32.totalorder 1, %s11
    %p201 = scmp.lt.s32.totalorder %s11, 3
    %p202 = pnand %p200, %p201
    %p203 = pneg %p202
    // Predicated region
    $region37: #{rb_forward.1} parent=5 // pred_check
      _
    $region38: #{rb_forward.1} parent=5 // pred_check_branch
      %205 = sbr.rel (%p202) target = $region40
    $region39: #{rb_forward.1} parent=5 // pred_region
      %s206 = ssub.s32 %s11, 1
      %p207 = scmp.lt.s32.totalorder %s20, 1
      %s208 = scalar_select %p207, %s20, 1
      %s209 = smul.addr %s208, 2
      %s210 = smul.addr %s209, 8
      %s211 = scalar_lea.vmem %s0, %s210
      %p212 = pneg %p49
      %p213 = pneg %p46
      %p214 = pneg %p70
      %p215 = pneg %p67
      %p216 = pneg %p91
      %p217 = pneg %p88
      %p218 = pneg %p112
      %p219 = pneg %p109
      %p220 = pneg %p133
      %p221 = pneg %p130
      %p222 = pneg %p161
      %p223 = pneg %p158
      %s224 = smul.u32 2, %s21
      %p225 = scmp.lt.s32.totalorder %s20, 1
      %s226 = scalar_select %p225, %s20, 1
      %p227 = scmp.lt.s32.totalorder %s224, 1
      %s228 = scalar_select %p227, %s224, 1
      %s229 = smul.addr %s226, 2
      %s230 = sadd.s32 %s228, %s229
      %s231 = smul.addr %s230, 8
      %s232 = scalar_lea.vmem %s5, %s231
      %p233 = scmp.lt.s32.totalorder %s20, 1
      %s234 = scalar_select %p233, %s20, 1
      %s235 = smul.addr %s234, 2
      %s236 = smul.addr %s235, 8
      %s237 = scalar_lea.vmem %s0, %s236
      %s238 = smul.u32 2, %s21
      %p239 = scmp.lt.s32.totalorder %s20, 1
      %s240 = scalar_select %p239, %s20, 1
      %p241 = scmp.lt.s32.totalorder %s238, 1
      %s242 = scalar_select %p241, %s238, 1
      %s243 = smul.addr %s240, 2
      %s244 = sadd.s32 %s242, %s243
      %s245 = smul.addr %s244, 8
      %s246 = scalar_lea.vmem %s5, %s245
      %s247 = smul.u32 2, %s21
      %s249 = smul.u32 %s21, 16
      %s250 = scalar_lea.vmem %s237, %s249
      %v251 = vld [vmem:[%s250] sm:$0xff]
      %v252 = vld [vmem:[%s250 + $0x8] sm:$0xff]
      %v253 = vpack.c.bf16 %v251, %v251
      %v254 = vpack.c.bf16 %v252, %v252
      %vm257 = vcmask 1040384
      %vm258 = vcmask 1044484
      %vm259 = vmor %vm257, %vm258
      %v260 = vrot.slane %v253, 7
      %v261 = vrot.slane %v260, 4
      %v262 = vrot.slane %v254, 7
      %v263 = vsel %vm259, %v261, %v262
      %v264 = vrot.slane %v262, 4
      %268 = vst [vmem:[#allocation2] sm:$0xe] %v260
      %269 = vst [vmem:[#allocation2 + $0x4] sm:$0xf] %v263
      %270 = vst [vmem:[#allocation2 + $0x8] sm:$0x1] %v264
      %271 = vst [vmem:[#allocation2] sm:$0x1] 0
      %272 = vst [vmem:[#allocation2 + $0x8] sm:$0x2] 0
      %v273 = vld [vmem:[#allocation2] sm:$0xf]
      %v274 = vld [vmem:[#allocation2 + $0x4] sm:$0xf]
      %v275 = vld [vmem:[#allocation2 + $0x8] sm:$0x1]
      %276 = vst [vmem:[#allocation4] sm:$0xf] %v273
      %277 = vst [vmem:[#allocation4 + $0xc] sm:$0xf] %v274
      %278 = vst [vmem:[#allocation4 + $0x18] sm:$0x1] %v275
      %v279 = vld [vmem:[#allocation2] sm:$0xf]
      %v280 = vld [vmem:[#allocation2 + $0x4] sm:$0xf]
      %v281 = vld [vmem:[#allocation2 + $0x8] sm:$0x3]
      %vm282 = vsmask.f32 3328
      %vm283 = vsmask.f32 7440
      %vm284 = vmor %vm282, %vm283
      %v286 = vshrl.u32 %v279, 16
      %v288 = vrot.slane %v286, 4
      %v289 = vshll.u32 %v279, 16
      %v291 = vrot.slane %v289, 5
      %v292 = vor.u32 %v288, %v291
      %v293 = vrot.slane %v292, 4
      %v295 = vshll.u32 %v280, 16
      %v297 = vrot.slane %v295, 5
      %v298 = vsel %vm284, %v293, %v297
      %v299 = vshrl.u32 %v280, 16
      %v301 = vrot.slane %v299, 4
      %v302 = vor.u32 %v301, %v297
      %v303 = vrot.slane %v302, 4
      %v305 = vshll.u32 %v281, 16
      %v307 = vrot.slane %v305, 5
      %v308 = vsel %vm284, %v303, %v307
      %v309 = vshrl.u32 %v281, 16
      %v311 = vrot.slane %v309, 4
      %v312 = vor.u32 %v311, %v307
      %v313 = vrot.slane %v312, 4
      %317 = vst [vmem:[#allocation4 + $0x4] sm:$0xf] %v298
      %318 = vst [vmem:[#allocation4 + $0x10] sm:$0xf] %v308
      %319 = vst [vmem:[#allocation4 + $0x1c] sm:$0x1] %v313
      %v320 = vld [vmem:[#allocation2] sm:$0xe]
      %v321 = vld [vmem:[#allocation2 + $0x4] sm:$0xf]
      %v322 = vld [vmem:[#allocation2 + $0x8] sm:$0x3]
      %vm326 = vcmask 1042432
      %vm327 = vcmask 1046532
      %vm328 = vmor %vm326, %vm327
      %v329 = vrot.slane %v320, 5
      %v330 = vrot.slane %v329, 4
      %v331 = vrot.slane %v321, 5
      %v332 = vsel %vm328, %v330, %v331
      %v333 = vrot.slane %v331, 4
      %v334 = vrot.slane %v322, 5
      %v335 = vsel %vm328, %v333, %v334
      %v336 = vrot.slane %v334, 4
      %340 = vst [vmem:[#allocation4 + $0x8] sm:$0xf] %v332
      %341 = vst [vmem:[#allocation4 + $0x14] sm:$0xf] %v335
      %342 = vst [vmem:[#allocation4 + $0x20] sm:$0x1] %v336
      %v343 = vld [vmem:[#allocation4] sm:$0xff]
      %v344 = vld [vmem:[#allocation4 + $0x8] sm:$0xf]
      %v345 = vld [vmem:[#allocation4 + $0xc] sm:$0xff]
      %v346 = vld [vmem:[#allocation4 + $0x14] sm:$0xf]
      %v347 = vld [vmem:[#allocation4 + $0x18] sm:$0x11]
      %v348 = vld [vmem:[#allocation4 + $0x20] sm:$0x1]
      %v349 = vld [vmem:[%s1] sm:$0xf]
      %v350 = vld [vmem:[%s1 + $0x4] sm:$0xf]
      %v351 = vld [vmem:[%s1 + $0x8] sm:$0xf]
      %v352 = vld [vmem:[%s1 + $0xc] sm:$0xf]
      %v353 = vld [vmem:[%s1 + $0x10] sm:$0xf]
      %v354 = vld [vmem:[%s1 + $0x14] sm:$0xf]
      %v355 = vld [vmem:[%s1 + $0x18] sm:$0xf]
      %v356 = vld [vmem:[%s1 + $0x1c] sm:$0xf]
      %v357 = vld [vmem:[%s1 + $0x20] sm:$0xf]
      %v358 = vld [vmem:[%s1 + $0x24] sm:$0xf]
      %v359 = vld [vmem:[%s1 + $0x28] sm:$0xf]
      %v360 = vld [vmem:[%s1 + $0x2c] sm:$0xf]
      %v361 = vld [vmem:[%s1 + $0x30] sm:$0xf]
      %v362 = vld [vmem:[%s1 + $0x34] sm:$0xf]
      %v363 = vld [vmem:[%s1 + $0x38] sm:$0xf]
      %v364 = vld [vmem:[%s1 + $0x3c] sm:$0xf]
      %v365 = vld [vmem:[%s1 + $0x40] sm:$0xf]
      %v366 = vld [vmem:[%s1 + $0x44] sm:$0xf]
      %v367 = vld [vmem:[%s1 + $0x48] sm:$0xf]
      %v368 = vld [vmem:[%s1 + $0x4c] sm:$0xf]
      %v369 = vld [vmem:[%s1 + $0x50] sm:$0xf]
      %v370 = vld [vmem:[%s1 + $0x54] sm:$0xf]
      %v371 = vld [vmem:[%s1 + $0x58] sm:$0xf]
      %v372 = vld [vmem:[%s1 + $0x5c] sm:$0xf]
      %v373 = vld [vmem:[%s1 + $0x60] sm:$0xf]
      %v374 = vld [vmem:[%s1 + $0x64] sm:$0xf]
      %v375 = vld [vmem:[%s1 + $0x68] sm:$0xf]
      %v376 = vld [vmem:[%s1 + $0x6c] sm:$0xf]
      %v377 = vld [vmem:[%s1 + $0x70] sm:$0xf]
      %v378 = vld [vmem:[%s1 + $0x74] sm:$0xf]
      %v379 = vld [vmem:[%s1 + $0x78] sm:$0xf]
      %v380 = vld [vmem:[%s1 + $0x7c] sm:$0xf]
      %v381 = vld [vmem:[%s1 + $0x80] sm:$0xf]
      %v382 = vld [vmem:[%s1 + $0x84] sm:$0xf]
      %v383 = vld [vmem:[%s1 + $0x88] sm:$0xf]
      %v384 = vld [vmem:[%s1 + $0x8c] sm:$0xf]
      %v385 = vld [vmem:[%s1 + $0x90] sm:$0xf]
      %v386 = vld [vmem:[%s1 + $0x94] sm:$0xf]
      %v387 = vld [vmem:[%s1 + $0x98] sm:$0xf]
      %v388 = vld [vmem:[%s1 + $0x9c] sm:$0xf]
      %v389 = vld [vmem:[%s1 + $0xa0] sm:$0xf]
      %v390 = vld [vmem:[%s1 + $0xa4] sm:$0xf]
      %v391 = vld [vmem:[%s1 + $0xa8] sm:$0xf]
      %v392 = vld [vmem:[%s1 + $0xac] sm:$0xf]
      %v393 = vld [vmem:[%s1 + $0xb0] sm:$0xf]
      %v394 = vld [vmem:[%s1 + $0xb4] sm:$0xf]
      %v395 = vld [vmem:[%s1 + $0xb8] sm:$0xf]
      %v396 = vld [vmem:[%s1 + $0xbc] sm:$0xf]
      %v397 = vld [vmem:[%s2] sm:$0x1]
      %v399 = vperm.slane %v397, 0
      %v407 = vunpack.c.l.b16 %v343
      %v408 = vunpack.c.h.b16 %v343
      %v409 = vunpack.c.l.b16 %v344
      %v410 = vunpack.c.l.b16 %v345
      %v411 = vunpack.c.h.b16 %v345
      %v412 = vunpack.c.l.b16 %v346
      %v413 = vunpack.c.l.b16 %v347
      %v414 = vunpack.c.h.b16 %v347
      %v415 = vunpack.c.l.b16 %v348
      %v416 = vpack.c.b16 %v410, %v407
      %v417 = vpack.c.b16 %v411, %v408
      %v418 = vpack.c.b16 %v412, %v409
      %v419 = vpack.c.b16 %v413, %v413
      %v420 = vpack.c.b16 %v414, %v414
      %v421 = vpack.c.b16 %v415, %v415
      %v476 = vunpack.c.l.b16 %v349
      %v477 = vunpack.c.l.b16 %v350
      %v478 = vunpack.c.l.b16 %v351
      %v479 = vunpack.c.l.b16 %v352
      %v480 = vunpack.c.l.b16 %v353
      %v481 = vunpack.c.l.b16 %v354
      %v482 = vunpack.c.l.b16 %v355
      %v483 = vunpack.c.l.b16 %v356
      %v484 = vunpack.c.l.b16 %v357
      %v485 = vunpack.c.l.b16 %v358
      %v486 = vunpack.c.l.b16 %v359
      %v487 = vunpack.c.l.b16 %v360
      %v488 = vunpack.c.l.b16 %v361
      %v489 = vunpack.c.l.b16 %v362
      %v490 = vunpack.c.l.b16 %v363
      %v491 = vunpack.c.l.b16 %v364
      %v492 = vunpack.c.l.b16 %v365
      %v493 = vunpack.c.l.b16 %v366
      %v494 = vunpack.c.l.b16 %v367
      %v495 = vunpack.c.l.b16 %v368
      %v496 = vunpack.c.l.b16 %v369
      %v497 = vunpack.c.l.b16 %v370
      %v498 = vunpack.c.l.b16 %v371
      %v499 = vunpack.c.l.b16 %v372
      %v500 = vunpack.c.l.b16 %v373
      %v501 = vunpack.c.l.b16 %v374
      %v502 = vunpack.c.l.b16 %v375
      %v503 = vunpack.c.l.b16 %v376
      %v504 = vunpack.c.l.b16 %v377
      %v505 = vunpack.c.l.b16 %v378
      %v506 = vunpack.c.l.b16 %v379
      %v507 = vunpack.c.l.b16 %v380
      %v508 = vunpack.c.l.b16 %v381
      %v509 = vunpack.c.l.b16 %v382
      %v510 = vunpack.c.l.b16 %v383
      %v511 = vunpack.c.l.b16 %v384
      %v512 = vunpack.c.l.b16 %v385
      %v513 = vunpack.c.l.b16 %v386
      %v514 = vunpack.c.l.b16 %v387
      %v515 = vunpack.c.l.b16 %v388
      %v516 = vunpack.c.l.b16 %v389
      %v517 = vunpack.c.l.b16 %v390
      %v518 = vunpack.c.l.b16 %v391
      %v519 = vunpack.c.l.b16 %v392
      %v520 = vunpack.c.l.b16 %v393
      %v521 = vunpack.c.l.b16 %v394
      %v522 = vunpack.c.l.b16 %v395
      %v523 = vunpack.c.l.b16 %v396
      %v524 = vpack.c.b16 %v477, %v476
      %v525 = vpack.c.b16 %v479, %v478
      %v526 = vpack.c.b16 %v481, %v480
      %v527 = vpack.c.b16 %v483, %v482
      %v528 = vpack.c.b16 %v485, %v484
      %v529 = vpack.c.b16 %v487, %v486
      %v530 = vpack.c.b16 %v489, %v488
      %v531 = vpack.c.b16 %v491, %v490
      %v532 = vpack.c.b16 %v493, %v492
      %v533 = vpack.c.b16 %v495, %v494
      %v534 = vpack.c.b16 %v497, %v496
      %v535 = vpack.c.b16 %v499, %v498
      %v536 = vpack.c.b16 %v501, %v500
      %v537 = vpack.c.b16 %v503, %v502
      %v538 = vpack.c.b16 %v505, %v504
      %v539 = vpack.c.b16 %v507, %v506
      %v540 = vpack.c.b16 %v509, %v508
      %v541 = vpack.c.b16 %v511, %v510
      %v542 = vpack.c.b16 %v513, %v512
      %v543 = vpack.c.b16 %v515, %v514
      %v544 = vpack.c.b16 %v517, %v516
      %v545 = vpack.c.b16 %v519, %v518
      %v546 = vpack.c.b16 %v521, %v520
      %v547 = vpack.c.b16 %v523, %v522
      %572 = vmatpush.bf16.msra.mxu0 %v531
      %573 = vmatpush.bf16.msra.mxu0 %v530
      %574 = vmatpush.bf16.msra.mxu0 %v529
      %575 = vmatpush.bf16.msra.mxu0 %v528
      %576 = vmatpush.bf16.msra.mxu0 %v527
      %577 = vmatpush.bf16.msra.mxu0 %v526
      %578 = vmatpush.bf16.msra.mxu0 %v525
      %579 = vmatpush.bf16.msra.mxu0 %v524
      %580 = vmatmul.bf16.gmra.mxu0 %v416
      %v581 = vpop.f32.mrf.mxu0
      %v582 = vadd.f32 %v399, %v581
      %v583 = vpop.f32.mrf.mxu0
      %v584 = vadd.f32 %v399, %v583
      %585 = vmatmul.bf16.gmra.mxu0 %v419
      %v586 = vpop.f32.mrf.mxu0
      %v587 = vadd.f32 %v399, %v586
      %v588 = vpop.f32.mrf.mxu0
      %589 = vdwg.mxu0
      %590 = vmatpush.bf16.msra.mxu0 %v539
      %591 = vmatpush.bf16.msra.mxu0 %v538
      %592 = vmatpush.bf16.msra.mxu0 %v537
      %593 = vmatpush.bf16.msra.mxu0 %v536
      %594 = vmatpush.bf16.msra.mxu0 %v535
      %595 = vmatpush.bf16.msra.mxu0 %v534
      %596 = vmatpush.bf16.msra.mxu0 %v533
      %597 = vmatpush.bf16.msra.mxu0 %v532
      %598 = vmatmul.bf16.gmra.mxu0 %v417
      %v599 = vpop.f32.mrf.mxu0
      %v600 = vadd.f32 %v582, %v599
      %v601 = vpop.f32.mrf.mxu0
      %v602 = vadd.f32 %v584, %v601
      %603 = vmatmul.bf16.gmra.mxu0 %v420
      %v604 = vpop.f32.mrf.mxu0
      %v605 = vadd.f32 %v587, %v604
      %v606 = vpop.f32.mrf.mxu0
      %607 = vdwg.mxu0
      %608 = vmatpush.bf16.msra.mxu0 %v547
      %609 = vmatpush.bf16.msra.mxu0 %v546
      %610 = vmatpush.bf16.msra.mxu0 %v545
      %611 = vmatpush.bf16.msra.mxu0 %v544
      %612 = vmatpush.bf16.msra.mxu0 %v543
      %613 = vmatpush.bf16.msra.mxu0 %v542
      %614 = vmatpush.bf16.msra.mxu0 %v541
      %615 = vmatpush.bf16.msra.mxu0 %v540
      %616 = vmatmul.bf16.gmra.mxu0 %v418
      %v617 = vpop.f32.mrf.mxu0
      %v618 = vadd.f32 %v600, %v617
      %v619 = vpop.f32.mrf.mxu0
      %v620 = vadd.f32 %v602, %v619
      %621 = vmatmul.bf16.gmra.mxu0 %v421
      %v622 = vpop.f32.mrf.mxu0
      %v623 = vadd.f32 %v605, %v622
      %v624 = vpop.f32.mrf.mxu0
      %625 = vdwg.mxu0
      %v626 = vmax.f32 %v618, 0.0
      %v627 = vmax.f32 %v620, 0.0
      %v628 = vmax.f32 %v623, 0.0
      %v629 = vlaneseq
      %v630 = vshrl.u32 %v629, 7
      %v631 = vadd.s32 %v630, 8
      %v632 = vadd.s32 %v630, 16
      %s633 = ssub.s32 %s249, 1
      %v634 = vstv %s633
      %v635 = vadd.s32 %v630, %v634
      %v636 = vadd.s32 %v631, %v634
      %v637 = vadd.s32 %v632, %v634
      %vm638 = vcmp.ge.s32.totalorder %v635, 0
      %vm639 = vcmp.ge.s32.totalorder %v636, 0
      %vm640 = vcmp.ge.s32.totalorder %v637, 0
      %vm641 = vcmp.lt.s32.totalorder %v635, 16
      %vm642 = vcmp.lt.s32.totalorder %v636, 16
      %vm643 = vcmp.lt.s32.totalorder %v637, 16
      %vm644 = vmand %vm638, %vm641
      %vm645 = vmand %vm639, %vm642
      %vm646 = vmand %vm640, %vm643
      %v647 = vsel %vm644, 1, 0
      %v648 = vsel %vm645, 1, 0
      %v649 = vsel %vm646, 1, 0
      %vm650 = vcmp.eq.s32.totalorder %v647, 1
      %vm651 = vcmp.eq.s32.totalorder %v648, 1
      %vm652 = vcmp.eq.s32.totalorder %v649, 1
      %v653 = vsel %vm650, %v626, 0.0
      %v654 = vsel %vm651, %v627, 0.0
      %v655 = vsel %vm652, %v628, 0.0
      %v656 = vpack.c.bf16 %v653, %v653
      %v657 = vpack.c.bf16 %v654, %v654
      %v658 = vpack.c.bf16 %v655, %v655
      %659 = vst [vmem:[#allocation3] sm:$0xf] %v656
      %660 = vst [vmem:[#allocation3 + $0x4] sm:$0xf] %v657
      %661 = vst [vmem:[#allocation3 + $0x8] sm:$0x1] %v658
      %v662 = vld [vmem:[#allocation3] sm:$0xf]
      %v663 = vld [vmem:[#allocation3 + $0x4] sm:$0xf]
      %664 = vst [vmem:[#allocation4] sm:$0xf] %v662
      %665 = vst [vmem:[#allocation4 + $0xc] sm:$0xf] %v663
      %v666 = vld [vmem:[#allocation3] sm:$0xf]
      %v667 = vld [vmem:[#allocation3 + $0x4] sm:$0xf]
      %v668 = vld [vmem:[#allocation3 + $0x8] sm:$0x1]
      %v670 = vshrl.u32 %v666, 16
      %v672 = vrot.slane %v670, 4
      %v673 = vshll.u32 %v666, 16
      %v675 = vrot.slane %v673, 5
      %v676 = vor.u32 %v672, %v675
      %v677 = vrot.slane %v676, 4
      %v679 = vshll.u32 %v667, 16
      %v681 = vrot.slane %v679, 5
      %v682 = vsel %vm284, %v677, %v681
      %v683 = vshrl.u32 %v667, 16
      %v685 = vrot.slane %v683, 4
      %v686 = vor.u32 %v685, %v681
      %v687 = vrot.slane %v686, 4
      %v689 = vshll.u32 %v668, 16
      %v691 = vrot.slane %v689, 5
      %v692 = vsel %vm284, %v687, %v691
      %695 = vst [vmem:[#allocation4 + $0x4] sm:$0xf] %v682
      %696 = vst [vmem:[#allocation4 + $0x10] sm:$0xf] %v692
      %v697 = vld [vmem:[#allocation3] sm:$0xe]
      %v698 = vld [vmem:[#allocation3 + $0x4] sm:$0xf]
      %v699 = vld [vmem:[#allocation3 + $0x8] sm:$0x1]
      %v703 = vrot.slane %v697, 5
      %v704 = vrot.slane %v703, 4
      %v705 = vrot.slane %v698, 5
      %v706 = vsel %vm328, %v704, %v705
      %v707 = vrot.slane %v705, 4
      %v708 = vrot.slane %v699, 5
      %v709 = vsel %vm328, %v707, %v708
      %712 = vst [vmem:[#allocation4 + $0x8] sm:$0xf] %v706
      %713 = vst [vmem:[#allocation4 + $0x14] sm:$0xf] %v709
      %v714 = vld [vmem:[#allocation4] sm:$0xff]
      %v715 = vld [vmem:[#allocation4 + $0x8] sm:$0xf]
      %v716 = vld [vmem:[#allocation4 + $0xc] sm:$0xff]
      %v717 = vld [vmem:[#allocation4 + $0x14] sm:$0xf]
      %v718 = vld [vmem:[%s3] sm:$0xf]
      %v719 = vld [vmem:[%s3 + $0x4] sm:$0xf]
      %v720 = vld [vmem:[%s3 + $0x8] sm:$0xf]
      %v721 = vld [vmem:[%s3 + $0xc] sm:$0xf]
      %v722 = vld [vmem:[%s3 + $0x10] sm:$0xf]
      %v723 = vld [vmem:[%s3 + $0x14] sm:$0xf]
      %v724 = vld [vmem:[%s3 + $0x18] sm:$0xf]
      %v725 = vld [vmem:[%s3 + $0x1c] sm:$0xf]
      %v726 = vld [vmem:[%s3 + $0x20] sm:$0xf]
      %v727 = vld [vmem:[%s3 + $0x24] sm:$0xf]
      %v728 = vld [vmem:[%s3 + $0x28] sm:$0xf]
      %v729 = vld [vmem:[%s3 + $0x2c] sm:$0xf]
      %v730 = vld [vmem:[%s3 + $0x30] sm:$0xf]
      %v731 = vld [vmem:[%s3 + $0x34] sm:$0xf]
      %v732 = vld [vmem:[%s3 + $0x38] sm:$0xf]
      %v733 = vld [vmem:[%s3 + $0x3c] sm:$0xf]
      %v734 = vld [vmem:[%s3 + $0x40] sm:$0xf]
      %v735 = vld [vmem:[%s3 + $0x44] sm:$0xf]
      %v736 = vld [vmem:[%s3 + $0x48] sm:$0xf]
      %v737 = vld [vmem:[%s3 + $0x4c] sm:$0xf]
      %v738 = vld [vmem:[%s3 + $0x50] sm:$0xf]
      %v739 = vld [vmem:[%s3 + $0x54] sm:$0xf]
      %v740 = vld [vmem:[%s3 + $0x58] sm:$0xf]
      %v741 = vld [vmem:[%s3 + $0x5c] sm:$0xf]
      %v742 = vld [vmem:[%s3 + $0x60] sm:$0xf]
      %v743 = vld [vmem:[%s3 + $0x64] sm:$0xf]
      %v744 = vld [vmem:[%s3 + $0x68] sm:$0xf]
      %v745 = vld [vmem:[%s3 + $0x6c] sm:$0xf]
      %v746 = vld [vmem:[%s3 + $0x70] sm:$0xf]
      %v747 = vld [vmem:[%s3 + $0x74] sm:$0xf]
      %v748 = vld [vmem:[%s3 + $0x78] sm:$0xf]
      %v749 = vld [vmem:[%s3 + $0x7c] sm:$0xf]
      %v750 = vld [vmem:[%s3 + $0x80] sm:$0xf]
      %v751 = vld [vmem:[%s3 + $0x84] sm:$0xf]
      %v752 = vld [vmem:[%s3 + $0x88] sm:$0xf]
      %v753 = vld [vmem:[%s3 + $0x8c] sm:$0xf]
      %v754 = vld [vmem:[%s3 + $0x90] sm:$0xf]
      %v755 = vld [vmem:[%s3 + $0x94] sm:$0xf]
      %v756 = vld [vmem:[%s3 + $0x98] sm:$0xf]
      %v757 = vld [vmem:[%s3 + $0x9c] sm:$0xf]
      %v758 = vld [vmem:[%s3 + $0xa0] sm:$0xf]
      %v759 = vld [vmem:[%s3 + $0xa4] sm:$0xf]
      %v760 = vld [vmem:[%s3 + $0xa8] sm:$0xf]
      %v761 = vld [vmem:[%s3 + $0xac] sm:$0xf]
      %v762 = vld [vmem:[%s3 + $0xb0] sm:$0xf]
      %v763 = vld [vmem:[%s3 + $0xb4] sm:$0xf]
      %v764 = vld [vmem:[%s3 + $0xb8] sm:$0xf]
      %v765 = vld [vmem:[%s3 + $0xbc] sm:$0xf]
      %v766 = vld [vmem:[%s250] sm:$0xff]
      %v767 = vld [vmem:[%s250 + $0x8] sm:$0xff]
      %v768 = vld [vmem:[%s4] sm:$0x1]
      %v770 = vperm.slane %v768, 0
      %v776 = vunpack.c.l.b16 %v714
      %v777 = vunpack.c.h.b16 %v714
      %v778 = vunpack.c.l.b16 %v715
      %v779 = vunpack.c.l.b16 %v716
      %v780 = vunpack.c.h.b16 %v716
      %v781 = vunpack.c.l.b16 %v717
      %v782 = vpack.c.b16 %v779, %v776
      %v783 = vpack.c.b16 %v780, %v777
      %v784 = vpack.c.b16 %v781, %v778
      %v836 = vunpack.c.l.b16 %v718
      %v837 = vunpack.c.l.b16 %v719
      %v838 = vunpack.c.l.b16 %v720
      %v839 = vunpack.c.l.b16 %v721
      %v840 = vunpack.c.l.b16 %v722
      %v841 = vunpack.c.l.b16 %v723
      %v842 = vunpack.c.l.b16 %v724
      %v843 = vunpack.c.l.b16 %v725
      %v844 = vunpack.c.l.b16 %v726
      %v845 = vunpack.c.l.b16 %v727
      %v846 = vunpack.c.l.b16 %v728
      %v847 = vunpack.c.l.b16 %v729
      %v848 = vunpack.c.l.b16 %v730
      %v849 = vunpack.c.l.b16 %v731
      %v850 = vunpack.c.l.b16 %v732
      %v851 = vunpack.c.l.b16 %v733
      %v852 = vunpack.c.l.b16 %v734
      %v853 = vunpack.c.l.b16 %v735
      %v854 = vunpack.c.l.b16 %v736
      %v855 = vunpack.c.l.b16 %v737
      %v856 = vunpack.c.l.b16 %v738
      %v857 = vunpack.c.l.b16 %v739
      %v858 = vunpack.c.l.b16 %v740
      %v859 = vunpack.c.l.b16 %v741
      %v860 = vunpack.c.l.b16 %v742
      %v861 = vunpack.c.l.b16 %v743
      %v862 = vunpack.c.l.b16 %v744
      %v863 = vunpack.c.l.b16 %v745
      %v864 = vunpack.c.l.b16 %v746
      %v865 = vunpack.c.l.b16 %v747
      %v866 = vunpack.c.l.b16 %v748
      %v867 = vunpack.c.l.b16 %v749
      %v868 = vunpack.c.l.b16 %v750
      %v869 = vunpack.c.l.b16 %v751
      %v870 = vunpack.c.l.b16 %v752
      %v871 = vunpack.c.l.b16 %v753
      %v872 = vunpack.c.l.b16 %v754
      %v873 = vunpack.c.l.b16 %v755
      %v874 = vunpack.c.l.b16 %v756
      %v875 = vunpack.c.l.b16 %v757
      %v876 = vunpack.c.l.b16 %v758
      %v877 = vunpack.c.l.b16 %v759
      %v878 = vunpack.c.l.b16 %v760
      %v879 = vunpack.c.l.b16 %v761
      %v880 = vunpack.c.l.b16 %v762
      %v881 = vunpack.c.l.b16 %v763
      %v882 = vunpack.c.l.b16 %v764
      %v883 = vunpack.c.l.b16 %v765
      %v884 = vpack.c.b16 %v837, %v836
      %v885 = vpack.c.b16 %v839, %v838
      %v886 = vpack.c.b16 %v841, %v840
      %v887 = vpack.c.b16 %v843, %v842
      %v888 = vpack.c.b16 %v845, %v844
      %v889 = vpack.c.b16 %v847, %v846
      %v890 = vpack.c.b16 %v849, %v848
      %v891 = vpack.c.b16 %v851, %v850
      %v892 = vpack.c.b16 %v853, %v852
      %v893 = vpack.c.b16 %v855, %v854
      %v894 = vpack.c.b16 %v857, %v856
      %v895 = vpack.c.b16 %v859, %v858
      %v896 = vpack.c.b16 %v861, %v860
      %v897 = vpack.c.b16 %v863, %v862
      %v898 = vpack.c.b16 %v865, %v864
      %v899 = vpack.c.b16 %v867, %v866
      %v900 = vpack.c.b16 %v869, %v868
      %v901 = vpack.c.b16 %v871, %v870
      %v902 = vpack.c.b16 %v873, %v872
      %v903 = vpack.c.b16 %v875, %v874
      %v904 = vpack.c.b16 %v877, %v876
      %v905 = vpack.c.b16 %v879, %v878
      %v906 = vpack.c.b16 %v881, %v880
      %v907 = vpack.c.b16 %v883, %v882
      %932 = vmatpush.bf16.msra.mxu0 %v891
      %933 = vmatpush.bf16.msra.mxu0 %v890
      %934 = vmatpush.bf16.msra.mxu0 %v889
      %935 = vmatpush.bf16.msra.mxu0 %v888
      %936 = vmatpush.bf16.msra.mxu0 %v887
      %937 = vmatpush.bf16.msra.mxu0 %v886
      %938 = vmatpush.bf16.msra.mxu0 %v885
      %939 = vmatpush.bf16.msra.mxu0 %v884
      %940 = vmatmul.bf16.gmra.mxu0 %v782
      %v941 = vpop.f32.mrf.mxu0
      %v942 = vadd.f32 %v770, %v941
      %v943 = vpop.f32.mrf.mxu0
      %v944 = vadd.f32 %v770, %v943
      %945 = vdwg.mxu0
      %946 = vmatpush.bf16.msra.mxu0 %v899
      %947 = vmatpush.bf16.msra.mxu0 %v898
      %948 = vmatpush.bf16.msra.mxu0 %v897
      %949 = vmatpush.bf16.msra.mxu0 %v896
      %950 = vmatpush.bf16.msra.mxu0 %v895
      %951 = vmatpush.bf16.msra.mxu0 %v894
      %952 = vmatpush.bf16.msra.mxu0 %v893
      %953 = vmatpush.bf16.msra.mxu0 %v892
      %954 = vmatmul.bf16.gmra.mxu0 %v783
      %v955 = vpop.f32.mrf.mxu0
      %v956 = vadd.f32 %v942, %v955
      %v957 = vpop.f32.mrf.mxu0
      %v958 = vadd.f32 %v944, %v957
      %959 = vdwg.mxu0
      %960 = vmatpush.bf16.msra.mxu0 %v907
      %961 = vmatpush.bf16.msra.mxu0 %v906
      %962 = vmatpush.bf16.msra.mxu0 %v905
      %963 = vmatpush.bf16.msra.mxu0 %v904
      %964 = vmatpush.bf16.msra.mxu0 %v903
      %965 = vmatpush.bf16.msra.mxu0 %v902
      %966 = vmatpush.bf16.msra.mxu0 %v901
      %967 = vmatpush.bf16.msra.mxu0 %v900
      %968 = vmatmul.bf16.gmra.mxu0 %v784
      %v969 = vpop.f32.mrf.mxu0
      %v970 = vadd.f32 %v956, %v969
      %v971 = vpop.f32.mrf.mxu0
      %v972 = vadd.f32 %v958, %v971
      %973 = vdwg.mxu0
      %v974 = vadd.f32 %v970, %v766
      %v975 = vadd.f32 %v972, %v767
      %976 = vst [vmem:[%s246] sm:$0xff] %v974
      %977 = vst [vmem:[%s246 + $0x8] sm:$0xff] %v975
      %s978 = smul.u32 2, %s21
      %p979 = scmp.lt.s32.totalorder %s20, 1
      %s980 = scalar_select %p979, %s20, 1
      %p981 = scmp.lt.s32.totalorder %s978, 1
      %s982 = scalar_select %p981, %s978, 1
      %s983 = smul.addr %s980, 2
      %s984 = sadd.s32 %s982, %s983
      %s985 = smul.addr %s984, 8
      %s986 = scalar_lea.vmem %s5, %s985
      // Predicated region
      $region41: #{rb_forward.1} parent=39 // pred_check
        %p987 = pneg %p158
      $region42: #{rb_forward.1} parent=39 // pred_check_branch
        %989 = sbr.rel (%p987) target = $region44
      $region43: #{rb_forward.1} parent=39 // pred_region
        %s990 = smul.u32 2, %s21
      $region44: #{rb_forward.1} parent=39 // pred_fallthru
        _
    $region40: #{rb_forward.1} parent=5 // pred_fallthru
      _
    %p991 = scmp.le.s32.totalorder 2, %s11
    // Predicated region
    $region45: #{rb_forward.1} parent=5 // pred_check
      %p992 = pneg %p991
    $region46: #{rb_forward.1} parent=5 // pred_check_branch
      %994 = sbr.rel (%p992) target = $region48
    $region47: #{rb_forward.1} parent=5 // pred_region
      %s995 = ssub.s32 %s11, 2
      // Predicated region
      $region49: #{rb_forward.1} parent=47 // pred_check
        %p996 = pneg %p164
      $region50: #{rb_forward.1} parent=47 // pred_check_branch
        %998 = sbr.rel (%p996) target = $region52
      $region51: #{rb_forward.1} parent=47 // pred_region
        %s999 = smul.u32 2, %s23
        %p1000 = scmp.lt.s32.totalorder %s22, 1
        %s1001 = scalar_select %p1000, %s22, 1
        %p1002 = scmp.lt.s32.totalorder %s999, 1
        %s1003 = scalar_select %p1002, %s999, 1
        %s1004 = smul.addr %s1001, 2
        %s1005 = sadd.s32 %s1003, %s1004
        %s1006 = smul.addr %s1005, 8
        %s1007 = scalar_lea.vmem %s5, %s1006
      $region52: #{rb_forward.1} parent=47 // pred_fallthru
        _
    $region48: #{rb_forward.1} parent=5 // pred_fallthru
      _
  $region6: #{rb_forward.1} parent=0 // loop_footer
    %s15 = sadd.s32 1, %s11
  $region7: #{rb_forward.1} parent=0 // loop_footer_branch
    %10 = sbr.rel target = $region3
  $region8: #{rb_forward.1} parent=0 // loop_exit
    _

</llo_original>
